<compile_context>
chip_gen: v7x
topology: tpu7x:2x2x1
jax: 0.10.0
libtpu: 0.0.40
codegen_flags: <defaults>
</compile_context>

<pallas_src>
import functools

import jax
import jax.numpy as jnp
from jax.experimental import pallas as pl
from jax.experimental.pallas import tpu as pltpu


def _gat_attention_kernel(x_ref, adj_ref, w_ref, a_src_ref, a_dst_ref, *rest,
                          n_head, n_type, out_dim, neg_slope, q_attn):
    """One batch-tile grid step of AttentionLayer.forward (eval mode, all heads)."""
    if q_attn:
        q_ref, w1_ref, w2a_ref, w2b_ref, o_ref = rest
    else:
        (o_ref,) = rest

    x = x_ref[...]                                   # (Tn, E, Din), input dtype
    adj = adj_ref[...]                               # (Tn, E, E), f32
    tn, n_nodes, din = x.shape

    # One fused MXU matmul for ALL heads and ALL edge types.
    x2 = x.reshape(tn * n_nodes, din)
    h_all = jnp.dot(x2, w_ref[...], preferred_element_type=jnp.float32)
    h_all = h_all.reshape(tn, n_nodes, n_head * n_type * out_dim)

    if q_attn:
        qv = q_ref[...]                              # (Tn, Din)

    head_outs = []
    for hd in range(n_head):                         # n_head is small & static
        scores = jnp.zeros((tn, n_nodes, n_nodes), jnp.float32)
        h_t = None
        for t in range(n_type):                      # n_type is small & static
            col = (hd * n_type + t) * out_dim
            h_t = h_all[:, :, col:col + out_dim]     # (Tn, E, Dout), f32

            a_src = a_src_ref[hd, t].astype(jnp.float32)   # (1, Dout)
            a_dst = a_dst_ref[hd, t].astype(jnp.float32)   # (1, Dout)

            if q_attn:
                # query gate: sigmoid(relu(q @ W1) @ W2), W2 pre-split in halves
                z = jnp.dot(qv, w1_ref[hd, t],
                            preferred_element_type=jnp.float32)
                z = jnp.maximum(z, 0.0)                               # (Tn, 2*Dout)
                g1 = 1.0 / (1.0 + jnp.exp(-jnp.dot(
                    z, w2a_ref[hd, t], preferred_element_type=jnp.float32)))
                g2 = 1.0 / (1.0 + jnp.exp(-jnp.dot(
                    z, w2b_ref[hd, t], preferred_element_type=jnp.float32)))
                a1 = g1 * a_src                                       # (Tn, Dout)
                a2 = g2 * a_dst
                f_src = jnp.sum(h_t * a1[:, None, :], axis=-1)        # (Tn, E)
                e_dst = jnp.sum(h_t * a2[:, None, :], axis=-1)
            else:
                f_src = jnp.sum(h_t * a_src[None, :, :], axis=-1)     # (Tn, E)
                e_dst = jnp.sum(h_t * a_dst[None, :, :], axis=-1)

            score = f_src[:, :, None] + e_dst[:, None, :]             # (Tn, E, E)
            score = jnp.where(score > 0, score, neg_slope * score)    # LeakyReLU(0.2)
            scores = scores + jnp.where(adj == float(t + 1), score, 0.0)

        # mask non-edges, softmax over the last (lane) axis == torch dim=2
        scores = jnp.where(adj > 0, scores, -1e30)
        m = jnp.max(scores, axis=-1, keepdims=True)
        p = jnp.exp(scores - m)
        s = jnp.sum(p, axis=-1, keepdims=True)
        coefs = p * pl.reciprocal(s, approx=False)

        # out[n, q, :] = sum_p coefs[n, p, q] * h[n, p, :]   (torch sum over
        # dim=1, using h from the LAST edge type — matches the reference code)
        coefs_t = jnp.swapaxes(coefs, 1, 2)                           # (Tn, E, E)
        out_h = jnp.einsum('bqp,bpd->bqd', coefs_t, h_t,
                           preferred_element_type=jnp.float32)
        head_outs.append(out_h)

    out = head_outs[0] if n_head == 1 else jnp.concatenate(head_outs, axis=-1)
    # outer ReLU from AttentionLayer (dropout is identity in eval mode)
    o_ref[...] = jnp.maximum(out, 0.0).astype(o_ref.dtype)


def attention_layer_forward(x, adj, W, a, *, q_attn=False, query_vec=None,
                            qattn_W1=None, qattn_W2=None, neg_slope=0.2,
                            tile_n=None):
    """Fused AttentionLayer.forward (eval mode).

    x:   (N, E, in_dim)                     node features
    adj: (N, E, E)                          edge types in {0..n_type}; 0 = no edge
    W:   (n_head, n_type, in_dim, out_dim)  stacked per-head/per-type W_type
    a:   (n_head, n_type, 2*out_dim)        stacked per-head/per-type a_type
    q_attn: query_vec (N, in_dim), qattn_W1 (n_head,n_type,in_dim,2*out_dim),
            qattn_W2 (n_head,n_type,2*out_dim,2*out_dim)
    returns (N, E, n_head*out_dim)
    """
    N, E, in_dim = x.shape
    n_head, n_type, _, out_dim = W.shape
    hid_dim = n_head * out_dim

    # One-time host-side parameter reshuffles (do at param-setup time in prod).
    # Column layout of the fused weight: col = (head*n_type + type)*out_dim + d
    W_all = jnp.transpose(W, (2, 0, 1, 3)).reshape(
        in_dim, n_head * n_type * out_dim)
    a_src = a[..., :out_dim].reshape(n_head, n_type, 1, out_dim)
    a_dst = a[..., out_dim:].reshape(n_head, n_type, 1, out_dim)
    if q_attn:
        w2a = qattn_W2[..., :out_dim]            # (n_head, n_type, 2*Dout, Dout)
        w2b = qattn_W2[..., out_dim:]

    # Batch tiling: pad the tail instead of asserting divisibility.
    if tile_n is None:
        tile_n = min(N, 8)
    pad = (-N) % tile_n
    if pad:
        x = jnp.pad(x, ((0, pad), (0, 0), (0, 0)))
        adj = jnp.pad(adj, ((0, pad), (0, 0), (0, 0)))
        if q_attn:
            query_vec = jnp.pad(query_vec, ((0, pad), (0, 0)))
    Np = N + pad
    n_btiles = Np // tile_n

    adj_f = adj.astype(jnp.float32)

    kernel = functools.partial(_gat_attention_kernel, n_head=n_head,
                               n_type=n_type, out_dim=out_dim,
                               neg_slope=neg_slope, q_attn=q_attn)

    in_specs = [
        pl.BlockSpec((tile_n, E, in_dim), lambda n: (n, 0, 0)),                 # x
        pl.BlockSpec((tile_n, E, E), lambda n: (n, 0, 0)),                      # adj
        pl.BlockSpec((in_dim, n_head * n_type * out_dim), lambda n: (0, 0)),    # W_all
        pl.BlockSpec((n_head, n_type, 1, out_dim), lambda n: (0, 0, 0, 0)),     # a_src
        pl.BlockSpec((n_head, n_type, 1, out_dim), lambda n: (0, 0, 0, 0)),     # a_dst
    ]
    inputs = [x, adj_f, W_all, a_src, a_dst]
    if q_attn:
        in_specs += [
            pl.BlockSpec((tile_n, in_dim), lambda n: (n, 0)),                           # query
            pl.BlockSpec((n_head, n_type, in_dim, 2 * out_dim), lambda n: (0, 0, 0, 0)),  # W1
            pl.BlockSpec((n_head, n_type, 2 * out_dim, out_dim), lambda n: (0, 0, 0, 0)),  # W2a
            pl.BlockSpec((n_head, n_type, 2 * out_dim, out_dim), lambda n: (0, 0, 0, 0)),  # W2b
        ]
        inputs += [query_vec, qattn_W1, w2a, w2b]

    # Advisory cost estimate so XLA schedules surrounding HLO sensibly.
    flops = (2 * Np * E * in_dim * n_head * n_type * out_dim      # x @ W_all
             + n_head * 2 * Np * E * E * out_dim                  # aggregation
             + 4 * Np * E * n_head * n_type * out_dim)            # f/e reductions
    if q_attn:
        flops += n_head * n_type * 2 * Np * (in_dim * 2 * out_dim
                                             + 2 * 2 * out_dim * out_dim)
    transcendentals = n_head * Np * E * E
    bytes_accessed = (sum(int(v.size) * v.dtype.itemsize for v in inputs)
                      + Np * E * hid_dim * x.dtype.itemsize)

    out = pl.pallas_call(
        kernel,
        out_shape=jax.ShapeDtypeStruct((Np, E, hid_dim), x.dtype),
        grid_spec=pltpu.PrefetchScalarGridSpec(
            num_scalar_prefetch=0,
            grid=(n_btiles,),
            in_specs=in_specs,
            out_specs=pl.BlockSpec((tile_n, E, hid_dim), lambda n: (n, 0, 0)),
        ),
        compiler_params=pltpu.CompilerParams(
            dimension_semantics=("parallel",)),
        cost_estimate=pl.CostEstimate(flops=int(flops),
                                      transcendentals=int(transcendentals),
                                      bytes_accessed=int(bytes_accessed)),
    )(*inputs)

    return out[:N]


def _attention_layer_reference(x, adj, W, a, *, q_attn=False, query_vec=None,
                               qattn_W1=None, qattn_W2=None, neg_slope=0.2):
    """Pure-JAX mirror of the PyTorch AttentionLayer.forward (eval mode)."""
    N, E, _ = x.shape
    n_head, n_type, _, out_dim = W.shape
    adj = adj.astype(jnp.float32)
    heads = []
    for hd in range(n_head):
        scores = jnp.zeros_like(adj)
        h = None
        for i in range(n_type):
            h = x @ W[hd, i]                                   # (N, E, d)
            d = h.shape[-1]
            a_input = jnp.concatenate(
                [jnp.tile(h, (1, 1, E)).reshape(N, E * E, -1),
                 jnp.tile(h, (1, E, 1))], axis=-1).reshape(N, E, E, 2 * d)
            if q_attn:
                qg = jax.nn.relu(query_vec @ qattn_W1[hd, i])
                qg = jax.nn.sigmoid(qg @ qattn_W2[hd, i])
                a_input = a_input * qg[:, None, None, :]
            score = (a_input @ a[hd, i][:, None])[..., 0]
            score = jnp.where(score > 0, score, neg_slope * score)
            scores = scores + jnp.where(adj == i + 1, score, 0.0)
        scores = jnp.where(adj > 0, scores, -1e30)
        coefs = jax.nn.softmax(scores, axis=2)
        hh = jnp.sum(coefs[..., None] * h[:, :, None, :], axis=1)
        heads.append(hh)
    return jax.nn.relu(jnp.concatenate(heads, axis=-1))


if __name__ == "__main__":
    # small config: batch=2, nodes=8, in_dim=32, hid_dim=32, n_head=2, n_type=3
    N, E, in_dim, hid_dim, n_head, n_type = 2, 8, 32, 32, 2, 3
    out_dim = hid_dim // n_head

    key = jax.random.PRNGKey(0)
    ks = jax.random.split(key, 7)
    x = jax.random.normal(ks[0], (N, E, in_dim), jnp.float32)
    adj = jax.random.randint(ks[1], (N, E, E), 0, n_type + 1).astype(jnp.float32)
    W = jax.random.normal(ks[2], (n_head, n_type, in_dim, out_dim), jnp.float32) * 0.3
    a = jax.random.normal(ks[3], (n_head, n_type, 2 * out_dim), jnp.float32) * 0.3
    query_vec = jax.random.normal(ks[4], (N, in_dim), jnp.float32)
    qW1 = jax.random.normal(ks[5], (n_head, n_type, in_dim, 2 * out_dim), jnp.float32) * 0.3
    qW2 = jax.random.normal(ks[6], (n_head, n_type, 2 * out_dim, 2 * out_dim), jnp.float32) * 0.3

    # --- q_attn = False ---
    out0 = jax.block_until_ready(attention_layer_forward(x, adj, W, a, q_attn=False))
    ref0 = _attention_layer_reference(x, adj, W, a, q_attn=False)
    assert out0.shape == (N, E, hid_dim)
    assert jnp.allclose(out0, ref0, atol=1e-4, rtol=1e-4), "mismatch (q_attn=False)"

    # --- q_attn = True ---
    out1 = jax.block_until_ready(attention_layer_forward(
        x, adj, W, a, q_attn=True, query_vec=query_vec, qattn_W1=qW1, qattn_W2=qW2))
    ref1 = _attention_layer_reference(
        x, adj, W, a, q_attn=True, query_vec=query_vec, qattn_W1=qW1, qattn_W2=qW2)
    assert out1.shape == (N, E, hid_dim)
    assert jnp.allclose(out1, ref1, atol=1e-4, rtol=1e-4), "mismatch (q_attn=True)"

    print("KERNEL_OK")
</pallas_src>

<mosaic_0001>
module attributes {stable_mosaic.version = 11 : i64} {
  func.func @_gat_attention_kernel(%arg0: i32, %arg1: memref<2x8x32xf32, #tpu.memory_space<vmem>>, %arg2: memref<2x8x8xf32, #tpu.memory_space<vmem>>, %arg3: memref<32x96xf32, #tpu.memory_space<vmem>>, %arg4: memref<2x3x1x16xf32, #tpu.memory_space<vmem>>, %arg5: memref<2x3x1x16xf32, #tpu.memory_space<vmem>>, %arg6: memref<2x8x32xf32, #tpu.memory_space<vmem>>) attributes {dimension_semantics = [#tpu.dimension_semantics<parallel>], iteration_bounds = array<i64: 1>, scalar_prefetch = 0 : i64, scratch_operands = 0 : i64, tpu.core_type = #tpu.core_type<tc>, window_params = [{transform_indices = @transform_0, window_bounds = array<i64: 2, 8, 32>}, {transform_indices = @transform_1, window_bounds = array<i64: 2, 8, 8>}, {pipeline_mode = #tpu.pipeline_mode<synchronous>, transform_indices = @transform_2, window_bounds = array<i64: 32, 96>}, {pipeline_mode = #tpu.pipeline_mode<synchronous>, transform_indices = @transform_3, window_bounds = array<i64: 2, 3, 1, 16>}, {pipeline_mode = #tpu.pipeline_mode<synchronous>, transform_indices = @transform_4, window_bounds = array<i64: 2, 3, 1, 16>}, {transform_indices = @transform_5, window_bounds = array<i64: 2, 8, 32>}]} {
    %c0 = arith.constant 0 : index
    %c0_0 = arith.constant 0 : index
    %c0_1 = arith.constant 0 : index
    %0 = vector.load %arg1[%c0, %c0_0, %c0_1] : memref<2x8x32xf32, #tpu.memory_space<vmem>>, vector<2x8x32xf32>
    %c0_2 = arith.constant 0 : index
    %c0_3 = arith.constant 0 : index
    %c0_4 = arith.constant 0 : index
    %1 = vector.load %arg2[%c0_2, %c0_3, %c0_4] : memref<2x8x8xf32, #tpu.memory_space<vmem>>, vector<2x8x8xf32>
    %2 = vector.shape_cast %0 : vector<2x8x32xf32> to vector<16x32xf32>
    %c0_5 = arith.constant 0 : index
    %c0_6 = arith.constant 0 : index
    %3 = vector.load %arg3[%c0_5, %c0_6] : memref<32x96xf32, #tpu.memory_space<vmem>>, vector<32x96xf32>
    %cst = arith.constant dense<0.000000e+00> : vector<16x96xf32>
    %4 = tpu.matmul %2, %3, %cst {dimension_numbers = #tpu.dot_dimension_numbers<[1], [0], [0], [1], [0, 0, 1, 1], [], []>} : vector<16x32xf32>, vector<32x96xf32>, vector<16x96xf32> -> vector<16x96xf32>
    %5 = vector.shape_cast %4 : vector<16x96xf32> to vector<2x8x96xf32>
    %cst_7 = arith.constant 0.000000e+00 : f32
    %6 = vector.broadcast %cst_7 : f32 to vector<2x8x8xf32>
    %7 = vector.extract_strided_slice %5 {offsets = [0, 0, 0], sizes = [2, 8, 16], strides = [1, 1, 1]} : vector<2x8x96xf32> to vector<2x8x16xf32>
    %c0_8 = arith.constant 0 : index
    %c0_9 = arith.constant 0 : index
    %c0_10 = arith.constant 0 : index
    %c0_11 = arith.constant 0 : index
    %8 = vector.load %arg4[%c0_8, %c0_9, %c0_10, %c0_11] : memref<2x3x1x16xf32, #tpu.memory_space<vmem>>, vector<1x1x1x16xf32>
    %9 = vector.shape_cast %8 : vector<1x1x1x16xf32> to vector<1x16xf32>
    %c0_12 = arith.constant 0 : index
    %c0_13 = arith.constant 0 : index
    %c0_14 = arith.constant 0 : index
    %c0_15 = arith.constant 0 : index
    %10 = vector.load %arg5[%c0_12, %c0_13, %c0_14, %c0_15] : memref<2x3x1x16xf32, #tpu.memory_space<vmem>>, vector<1x1x1x16xf32>
    %11 = vector.shape_cast %10 : vector<1x1x1x16xf32> to vector<1x16xf32>
    %12 = vector.shape_cast %9 : vector<1x16xf32> to vector<1x1x16xf32>
    %13 = vector.broadcast %12 : vector<1x1x16xf32> to vector<2x8x16xf32>
    %14 = arith.mulf %7, %13 : vector<2x8x16xf32>
    %cst_16 = arith.constant dense<0.000000e+00> : vector<2x8xf32>
    %15 = vector.multi_reduction <add>, %14, %cst_16 [2] : vector<2x8x16xf32> to vector<2x8xf32>
    %16 = vector.shape_cast %11 : vector<1x16xf32> to vector<1x1x16xf32>
    %17 = vector.broadcast %16 : vector<1x1x16xf32> to vector<2x8x16xf32>
    %18 = arith.mulf %7, %17 : vector<2x8x16xf32>
    %cst_17 = arith.constant dense<0.000000e+00> : vector<2x8xf32>
    %19 = vector.multi_reduction <add>, %18, %cst_17 [2] : vector<2x8x16xf32> to vector<2x8xf32>
    %20 = vector.shape_cast %15 : vector<2x8xf32> to vector<2x8x1xf32>
    %21 = vector.shape_cast %19 : vector<2x8xf32> to vector<2x1x8xf32>
    %22 = vector.broadcast %20 : vector<2x8x1xf32> to vector<2x8x8xf32>
    %23 = vector.broadcast %21 : vector<2x1x8xf32> to vector<2x8x8xf32>
    %24 = arith.addf %22, %23 : vector<2x8x8xf32>
    %cst_18 = arith.constant 0.000000e+00 : f32
    %25 = vector.broadcast %cst_18 : f32 to vector<2x8x8xf32>
    %26 = arith.cmpf ogt, %24, %25 : vector<2x8x8xf32>
    %cst_19 = arith.constant 2.000000e-01 : f32
    %27 = vector.broadcast %cst_19 : f32 to vector<2x8x8xf32>
    %28 = arith.mulf %27, %24 : vector<2x8x8xf32>
    %29 = arith.select %26, %24, %28 : vector<2x8x8xi1>, vector<2x8x8xf32>
    %cst_20 = arith.constant 1.000000e+00 : f32
    %30 = vector.broadcast %cst_20 : f32 to vector<2x8x8xf32>
    %31 = arith.cmpf oeq, %1, %30 : vector<2x8x8xf32>
    %cst_21 = arith.constant 0.000000e+00 : f32
    %32 = vector.broadcast %cst_21 : f32 to vector<2x8x8xf32>
    %33 = arith.select %31, %29, %32 : vector<2x8x8xi1>, vector<2x8x8xf32>
    %34 = arith.addf %6, %33 : vector<2x8x8xf32>
    %35 = vector.extract_strided_slice %5 {offsets = [0, 0, 16], sizes = [2, 8, 16], strides = [1, 1, 1]} : vector<2x8x96xf32> to vector<2x8x16xf32>
    %c0_22 = arith.constant 0 : index
    %c1 = arith.constant 1 : index
    %c0_23 = arith.constant 0 : index
    %c0_24 = arith.constant 0 : index
    %36 = vector.load %arg4[%c0_22, %c1, %c0_23, %c0_24] : memref<2x3x1x16xf32, #tpu.memory_space<vmem>>, vector<1x1x1x16xf32>
    %37 = vector.shape_cast %36 : vector<1x1x1x16xf32> to vector<1x16xf32>
    %c0_25 = arith.constant 0 : index
    %c1_26 = arith.constant 1 : index
    %c0_27 = arith.constant 0 : index
    %c0_28 = arith.constant 0 : index
    %38 = vector.load %arg5[%c0_25, %c1_26, %c0_27, %c0_28] : memref<2x3x1x16xf32, #tpu.memory_space<vmem>>, vector<1x1x1x16xf32>
    %39 = vector.shape_cast %38 : vector<1x1x1x16xf32> to vector<1x16xf32>
    %40 = vector.shape_cast %37 : vector<1x16xf32> to vector<1x1x16xf32>
    %41 = vector.broadcast %40 : vector<1x1x16xf32> to vector<2x8x16xf32>
    %42 = arith.mulf %35, %41 : vector<2x8x16xf32>
    %cst_29 = arith.constant dense<0.000000e+00> : vector<2x8xf32>
    %43 = vector.multi_reduction <add>, %42, %cst_29 [2] : vector<2x8x16xf32> to vector<2x8xf32>
    %44 = vector.shape_cast %39 : vector<1x16xf32> to vector<1x1x16xf32>
    %45 = vector.broadcast %44 : vector<1x1x16xf32> to vector<2x8x16xf32>
    %46 = arith.mulf %35, %45 : vector<2x8x16xf32>
    %cst_30 = arith.constant dense<0.000000e+00> : vector<2x8xf32>
    %47 = vector.multi_reduction <add>, %46, %cst_30 [2] : vector<2x8x16xf32> to vector<2x8xf32>
    %48 = vector.shape_cast %43 : vector<2x8xf32> to vector<2x8x1xf32>
    %49 = vector.shape_cast %47 : vector<2x8xf32> to vector<2x1x8xf32>
    %50 = vector.broadcast %48 : vector<2x8x1xf32> to vector<2x8x8xf32>
    %51 = vector.broadcast %49 : vector<2x1x8xf32> to vector<2x8x8xf32>
    %52 = arith.addf %50, %51 : vector<2x8x8xf32>
    %cst_31 = arith.constant 0.000000e+00 : f32
    %53 = vector.broadcast %cst_31 : f32 to vector<2x8x8xf32>
    %54 = arith.cmpf ogt, %52, %53 : vector<2x8x8xf32>
    %cst_32 = arith.constant 2.000000e-01 : f32
    %55 = vector.broadcast %cst_32 : f32 to vector<2x8x8xf32>
    %56 = arith.mulf %55, %52 : vector<2x8x8xf32>
    %57 = arith.select %54, %52, %56 : vector<2x8x8xi1>, vector<2x8x8xf32>
    %cst_33 = arith.constant 2.000000e+00 : f32
    %58 = vector.broadcast %cst_33 : f32 to vector<2x8x8xf32>
    %59 = arith.cmpf oeq, %1, %58 : vector<2x8x8xf32>
    %cst_34 = arith.constant 0.000000e+00 : f32
    %60 = vector.broadcast %cst_34 : f32 to vector<2x8x8xf32>
    %61 = arith.select %59, %57, %60 : vector<2x8x8xi1>, vector<2x8x8xf32>
    %62 = arith.addf %34, %61 : vector<2x8x8xf32>
    %63 = vector.extract_strided_slice %5 {offsets = [0, 0, 32], sizes = [2, 8, 16], strides = [1, 1, 1]} : vector<2x8x96xf32> to vector<2x8x16xf32>
    %c0_35 = arith.constant 0 : index
    %c2 = arith.constant 2 : index
    %c0_36 = arith.constant 0 : index
    %c0_37 = arith.constant 0 : index
    %64 = vector.load %arg4[%c0_35, %c2, %c0_36, %c0_37] : memref<2x3x1x16xf32, #tpu.memory_space<vmem>>, vector<1x1x1x16xf32>
    %65 = vector.shape_cast %64 : vector<1x1x1x16xf32> to vector<1x16xf32>
    %c0_38 = arith.constant 0 : index
    %c2_39 = arith.constant 2 : index
    %c0_40 = arith.constant 0 : index
    %c0_41 = arith.constant 0 : index
    %66 = vector.load %arg5[%c0_38, %c2_39, %c0_40, %c0_41] : memref<2x3x1x16xf32, #tpu.memory_space<vmem>>, vector<1x1x1x16xf32>
    %67 = vector.shape_cast %66 : vector<1x1x1x16xf32> to vector<1x16xf32>
    %68 = vector.shape_cast %65 : vector<1x16xf32> to vector<1x1x16xf32>
    %69 = vector.broadcast %68 : vector<1x1x16xf32> to vector<2x8x16xf32>
    %70 = arith.mulf %63, %69 : vector<2x8x16xf32>
    %cst_42 = arith.constant dense<0.000000e+00> : vector<2x8xf32>
    %71 = vector.multi_reduction <add>, %70, %cst_42 [2] : vector<2x8x16xf32> to vector<2x8xf32>
    %72 = vector.shape_cast %67 : vector<1x16xf32> to vector<1x1x16xf32>
    %73 = vector.broadcast %72 : vector<1x1x16xf32> to vector<2x8x16xf32>
    %74 = arith.mulf %63, %73 : vector<2x8x16xf32>
    %cst_43 = arith.constant dense<0.000000e+00> : vector<2x8xf32>
    %75 = vector.multi_reduction <add>, %74, %cst_43 [2] : vector<2x8x16xf32> to vector<2x8xf32>
    %76 = vector.shape_cast %71 : vector<2x8xf32> to vector<2x8x1xf32>
    %77 = vector.shape_cast %75 : vector<2x8xf32> to vector<2x1x8xf32>
    %78 = vector.broadcast %76 : vector<2x8x1xf32> to vector<2x8x8xf32>
    %79 = vector.broadcast %77 : vector<2x1x8xf32> to vector<2x8x8xf32>
    %80 = arith.addf %78, %79 : vector<2x8x8xf32>
    %cst_44 = arith.constant 0.000000e+00 : f32
    %81 = vector.broadcast %cst_44 : f32 to vector<2x8x8xf32>
    %82 = arith.cmpf ogt, %80, %81 : vector<2x8x8xf32>
    %cst_45 = arith.constant 2.000000e-01 : f32
    %83 = vector.broadcast %cst_45 : f32 to vector<2x8x8xf32>
    %84 = arith.mulf %83, %80 : vector<2x8x8xf32>
    %85 = arith.select %82, %80, %84 : vector<2x8x8xi1>, vector<2x8x8xf32>
    %cst_46 = arith.constant 3.000000e+00 : f32
    %86 = vector.broadcast %cst_46 : f32 to vector<2x8x8xf32>
    %87 = arith.cmpf oeq, %1, %86 : vector<2x8x8xf32>
    %cst_47 = arith.constant 0.000000e+00 : f32
    %88 = vector.broadcast %cst_47 : f32 to vector<2x8x8xf32>
    %89 = arith.select %87, %85, %88 : vector<2x8x8xi1>, vector<2x8x8xf32>
    %90 = arith.addf %62, %89 : vector<2x8x8xf32>
    %cst_48 = arith.constant 0.000000e+00 : f32
    %91 = vector.broadcast %cst_48 : f32 to vector<2x8x8xf32>
    %92 = arith.cmpf ogt, %1, %91 : vector<2x8x8xf32>
    %cst_49 = arith.constant -1.000000e+30 : f32
    %93 = vector.broadcast %cst_49 : f32 to vector<2x8x8xf32>
    %94 = arith.select %92, %90, %93 : vector<2x8x8xi1>, vector<2x8x8xf32>
    %cst_50 = arith.constant dense<0xFF800000> : vector<2x8xf32>
    %95 = vector.multi_reduction <maximumf>, %94, %cst_50 [2] : vector<2x8x8xf32> to vector<2x8xf32>
    %96 = vector.shape_cast %95 : vector<2x8xf32> to vector<2x8x1xf32>
    %97 = vector.broadcast %96 : vector<2x8x1xf32> to vector<2x8x8xf32>
    %98 = arith.subf %94, %97 : vector<2x8x8xf32>
    %99 = math.exp %98 : vector<2x8x8xf32>
    %cst_51 = arith.constant dense<0.000000e+00> : vector<2x8xf32>
    %100 = vector.multi_reduction <add>, %99, %cst_51 [2] : vector<2x8x8xf32> to vector<2x8xf32>
    %101 = vector.shape_cast %100 : vector<2x8xf32> to vector<2x8x1xf32>
    %102 = tpu.reciprocal %101 : vector<2x8x1xf32> -> vector<2x8x1xf32>
    %103 = vector.broadcast %102 : vector<2x8x1xf32> to vector<2x8x8xf32>
    %104 = arith.mulf %99, %103 : vector<2x8x8xf32>
    %105 = tpu.transpose %104, [0, 2, 1] : vector<2x8x8xf32> -> vector<2x8x8xf32>
    "tpu.trace_start"() <{level = 10 : i32, message = "bqp,bpd->bqd"}> : () -> ()
    %cst_52 = arith.constant dense<0.000000e+00> : vector<2x8x16xf32>
    %106 = tpu.matmul %105, %63, %cst_52 {dimension_numbers = #tpu.dot_dimension_numbers<[2], [1], [1], [2], [0, 0, 0, 1, 1, 2], [0], [0]>} : vector<2x8x8xf32>, vector<2x8x16xf32>, vector<2x8x16xf32> -> vector<2x8x16xf32>
    %cst_53 = arith.constant 0.000000e+00 : f32
    "tpu.trace_stop"() : () -> ()
    %107 = vector.broadcast %cst_53 : f32 to vector<2x8x8xf32>
    %108 = vector.extract_strided_slice %5 {offsets = [0, 0, 48], sizes = [2, 8, 16], strides = [1, 1, 1]} : vector<2x8x96xf32> to vector<2x8x16xf32>
    %c1_54 = arith.constant 1 : index
    %c0_55 = arith.constant 0 : index
    %c0_56 = arith.constant 0 : index
    %c0_57 = arith.constant 0 : index
    %109 = vector.load %arg4[%c1_54, %c0_55, %c0_56, %c0_57] : memref<2x3x1x16xf32, #tpu.memory_space<vmem>>, vector<1x1x1x16xf32>
    %110 = vector.shape_cast %109 : vector<1x1x1x16xf32> to vector<1x16xf32>
    %c1_58 = arith.constant 1 : index
    %c0_59 = arith.constant 0 : index
    %c0_60 = arith.constant 0 : index
    %c0_61 = arith.constant 0 : index
    %111 = vector.load %arg5[%c1_58, %c0_59, %c0_60, %c0_61] : memref<2x3x1x16xf32, #tpu.memory_space<vmem>>, vector<1x1x1x16xf32>
    %112 = vector.shape_cast %111 : vector<1x1x1x16xf32> to vector<1x16xf32>
    %113 = vector.shape_cast %110 : vector<1x16xf32> to vector<1x1x16xf32>
    %114 = vector.broadcast %113 : vector<1x1x16xf32> to vector<2x8x16xf32>
    %115 = arith.mulf %108, %114 : vector<2x8x16xf32>
    %cst_62 = arith.constant dense<0.000000e+00> : vector<2x8xf32>
    %116 = vector.multi_reduction <add>, %115, %cst_62 [2] : vector<2x8x16xf32> to vector<2x8xf32>
    %117 = vector.shape_cast %112 : vector<1x16xf32> to vector<1x1x16xf32>
    %118 = vector.broadcast %117 : vector<1x1x16xf32> to vector<2x8x16xf32>
    %119 = arith.mulf %108, %118 : vector<2x8x16xf32>
    %cst_63 = arith.constant dense<0.000000e+00> : vector<2x8xf32>
    %120 = vector.multi_reduction <add>, %119, %cst_63 [2] : vector<2x8x16xf32> to vector<2x8xf32>
    %121 = vector.shape_cast %116 : vector<2x8xf32> to vector<2x8x1xf32>
    %122 = vector.shape_cast %120 : vector<2x8xf32> to vector<2x1x8xf32>
    %123 = vector.broadcast %121 : vector<2x8x1xf32> to vector<2x8x8xf32>
    %124 = vector.broadcast %122 : vector<2x1x8xf32> to vector<2x8x8xf32>
    %125 = arith.addf %123, %124 : vector<2x8x8xf32>
    %cst_64 = arith.constant 0.000000e+00 : f32
    %126 = vector.broadcast %cst_64 : f32 to vector<2x8x8xf32>
    %127 = arith.cmpf ogt, %125, %126 : vector<2x8x8xf32>
    %cst_65 = arith.constant 2.000000e-01 : f32
    %128 = vector.broadcast %cst_65 : f32 to vector<2x8x8xf32>
    %129 = arith.mulf %128, %125 : vector<2x8x8xf32>
    %130 = arith.select %127, %125, %129 : vector<2x8x8xi1>, vector<2x8x8xf32>
    %cst_66 = arith.constant 1.000000e+00 : f32
    %131 = vector.broadcast %cst_66 : f32 to vector<2x8x8xf32>
    %132 = arith.cmpf oeq, %1, %131 : vector<2x8x8xf32>
    %cst_67 = arith.constant 0.000000e+00 : f32
    %133 = vector.broadcast %cst_67 : f32 to vector<2x8x8xf32>
    %134 = arith.select %132, %130, %133 : vector<2x8x8xi1>, vector<2x8x8xf32>
    %135 = arith.addf %107, %134 : vector<2x8x8xf32>
    %136 = vector.extract_strided_slice %5 {offsets = [0, 0, 64], sizes = [2, 8, 16], strides = [1, 1, 1]} : vector<2x8x96xf32> to vector<2x8x16xf32>
    %c1_68 = arith.constant 1 : index
    %c1_69 = arith.constant 1 : index
    %c0_70 = arith.constant 0 : index
    %c0_71 = arith.constant 0 : index
    %137 = vector.load %arg4[%c1_68, %c1_69, %c0_70, %c0_71] : memref<2x3x1x16xf32, #tpu.memory_space<vmem>>, vector<1x1x1x16xf32>
    %138 = vector.shape_cast %137 : vector<1x1x1x16xf32> to vector<1x16xf32>
    %c1_72 = arith.constant 1 : index
    %c1_73 = arith.constant 1 : index
    %c0_74 = arith.constant 0 : index
    %c0_75 = arith.constant 0 : index
    %139 = vector.load %arg5[%c1_72, %c1_73, %c0_74, %c0_75] : memref<2x3x1x16xf32, #tpu.memory_space<vmem>>, vector<1x1x1x16xf32>
    %140 = vector.shape_cast %139 : vector<1x1x1x16xf32> to vector<1x16xf32>
    %141 = vector.shape_cast %138 : vector<1x16xf32> to vector<1x1x16xf32>
    %142 = vector.broadcast %141 : vector<1x1x16xf32> to vector<2x8x16xf32>
    %143 = arith.mulf %136, %142 : vector<2x8x16xf32>
    %cst_76 = arith.constant dense<0.000000e+00> : vector<2x8xf32>
    %144 = vector.multi_reduction <add>, %143, %cst_76 [2] : vector<2x8x16xf32> to vector<2x8xf32>
    %145 = vector.shape_cast %140 : vector<1x16xf32> to vector<1x1x16xf32>
    %146 = vector.broadcast %145 : vector<1x1x16xf32> to vector<2x8x16xf32>
    %147 = arith.mulf %136, %146 : vector<2x8x16xf32>
    %cst_77 = arith.constant dense<0.000000e+00> : vector<2x8xf32>
    %148 = vector.multi_reduction <add>, %147, %cst_77 [2] : vector<2x8x16xf32> to vector<2x8xf32>
    %149 = vector.shape_cast %144 : vector<2x8xf32> to vector<2x8x1xf32>
    %150 = vector.shape_cast %148 : vector<2x8xf32> to vector<2x1x8xf32>
    %151 = vector.broadcast %149 : vector<2x8x1xf32> to vector<2x8x8xf32>
    %152 = vector.broadcast %150 : vector<2x1x8xf32> to vector<2x8x8xf32>
    %153 = arith.addf %151, %152 : vector<2x8x8xf32>
    %cst_78 = arith.constant 0.000000e+00 : f32
    %154 = vector.broadcast %cst_78 : f32 to vector<2x8x8xf32>
    %155 = arith.cmpf ogt, %153, %154 : vector<2x8x8xf32>
    %cst_79 = arith.constant 2.000000e-01 : f32
    %156 = vector.broadcast %cst_79 : f32 to vector<2x8x8xf32>
    %157 = arith.mulf %156, %153 : vector<2x8x8xf32>
    %158 = arith.select %155, %153, %157 : vector<2x8x8xi1>, vector<2x8x8xf32>
    %cst_80 = arith.constant 2.000000e+00 : f32
    %159 = vector.broadcast %cst_80 : f32 to vector<2x8x8xf32>
    %160 = arith.cmpf oeq, %1, %159 : vector<2x8x8xf32>
    %cst_81 = arith.constant 0.000000e+00 : f32
    %161 = vector.broadcast %cst_81 : f32 to vector<2x8x8xf32>
    %162 = arith.select %160, %158, %161 : vector<2x8x8xi1>, vector<2x8x8xf32>
    %163 = arith.addf %135, %162 : vector<2x8x8xf32>
    %164 = vector.extract_strided_slice %5 {offsets = [0, 0, 80], sizes = [2, 8, 16], strides = [1, 1, 1]} : vector<2x8x96xf32> to vector<2x8x16xf32>
    %c1_82 = arith.constant 1 : index
    %c2_83 = arith.constant 2 : index
    %c0_84 = arith.constant 0 : index
    %c0_85 = arith.constant 0 : index
    %165 = vector.load %arg4[%c1_82, %c2_83, %c0_84, %c0_85] : memref<2x3x1x16xf32, #tpu.memory_space<vmem>>, vector<1x1x1x16xf32>
    %166 = vector.shape_cast %165 : vector<1x1x1x16xf32> to vector<1x16xf32>
    %c1_86 = arith.constant 1 : index
    %c2_87 = arith.constant 2 : index
    %c0_88 = arith.constant 0 : index
    %c0_89 = arith.constant 0 : index
    %167 = vector.load %arg5[%c1_86, %c2_87, %c0_88, %c0_89] : memref<2x3x1x16xf32, #tpu.memory_space<vmem>>, vector<1x1x1x16xf32>
    %168 = vector.shape_cast %167 : vector<1x1x1x16xf32> to vector<1x16xf32>
    %169 = vector.shape_cast %166 : vector<1x16xf32> to vector<1x1x16xf32>
    %170 = vector.broadcast %169 : vector<1x1x16xf32> to vector<2x8x16xf32>
    %171 = arith.mulf %164, %170 : vector<2x8x16xf32>
    %cst_90 = arith.constant dense<0.000000e+00> : vector<2x8xf32>
    %172 = vector.multi_reduction <add>, %171, %cst_90 [2] : vector<2x8x16xf32> to vector<2x8xf32>
    %173 = vector.shape_cast %168 : vector<1x16xf32> to vector<1x1x16xf32>
    %174 = vector.broadcast %173 : vector<1x1x16xf32> to vector<2x8x16xf32>
    %175 = arith.mulf %164, %174 : vector<2x8x16xf32>
    %cst_91 = arith.constant dense<0.000000e+00> : vector<2x8xf32>
    %176 = vector.multi_reduction <add>, %175, %cst_91 [2] : vector<2x8x16xf32> to vector<2x8xf32>
    %177 = vector.shape_cast %172 : vector<2x8xf32> to vector<2x8x1xf32>
    %178 = vector.shape_cast %176 : vector<2x8xf32> to vector<2x1x8xf32>
    %179 = vector.broadcast %177 : vector<2x8x1xf32> to vector<2x8x8xf32>
    %180 = vector.broadcast %178 : vector<2x1x8xf32> to vector<2x8x8xf32>
    %181 = arith.addf %179, %180 : vector<2x8x8xf32>
    %cst_92 = arith.constant 0.000000e+00 : f32
    %182 = vector.broadcast %cst_92 : f32 to vector<2x8x8xf32>
    %183 = arith.cmpf ogt, %181, %182 : vector<2x8x8xf32>
    %cst_93 = arith.constant 2.000000e-01 : f32
    %184 = vector.broadcast %cst_93 : f32 to vector<2x8x8xf32>
    %185 = arith.mulf %184, %181 : vector<2x8x8xf32>
    %186 = arith.select %183, %181, %185 : vector<2x8x8xi1>, vector<2x8x8xf32>
    %cst_94 = arith.constant 3.000000e+00 : f32
    %187 = vector.broadcast %cst_94 : f32 to vector<2x8x8xf32>
    %188 = arith.cmpf oeq, %1, %187 : vector<2x8x8xf32>
    %cst_95 = arith.constant 0.000000e+00 : f32
    %189 = vector.broadcast %cst_95 : f32 to vector<2x8x8xf32>
    %190 = arith.select %188, %186, %189 : vector<2x8x8xi1>, vector<2x8x8xf32>
    %191 = arith.addf %163, %190 : vector<2x8x8xf32>
    %cst_96 = arith.constant 0.000000e+00 : f32
    %192 = vector.broadcast %cst_96 : f32 to vector<2x8x8xf32>
    %193 = arith.cmpf ogt, %1, %192 : vector<2x8x8xf32>
    %cst_97 = arith.constant -1.000000e+30 : f32
    %194 = vector.broadcast %cst_97 : f32 to vector<2x8x8xf32>
    %195 = arith.select %193, %191, %194 : vector<2x8x8xi1>, vector<2x8x8xf32>
    %cst_98 = arith.constant dense<0xFF800000> : vector<2x8xf32>
    %196 = vector.multi_reduction <maximumf>, %195, %cst_98 [2] : vector<2x8x8xf32> to vector<2x8xf32>
    %197 = vector.shape_cast %196 : vector<2x8xf32> to vector<2x8x1xf32>
    %198 = vector.broadcast %197 : vector<2x8x1xf32> to vector<2x8x8xf32>
    %199 = arith.subf %195, %198 : vector<2x8x8xf32>
    %200 = math.exp %199 : vector<2x8x8xf32>
    %cst_99 = arith.constant dense<0.000000e+00> : vector<2x8xf32>
    %201 = vector.multi_reduction <add>, %200, %cst_99 [2] : vector<2x8x8xf32> to vector<2x8xf32>
    %202 = vector.shape_cast %201 : vector<2x8xf32> to vector<2x8x1xf32>
    %203 = tpu.reciprocal %202 : vector<2x8x1xf32> -> vector<2x8x1xf32>
    %204 = vector.broadcast %203 : vector<2x8x1xf32> to vector<2x8x8xf32>
    %205 = arith.mulf %200, %204 : vector<2x8x8xf32>
    %206 = tpu.transpose %205, [0, 2, 1] : vector<2x8x8xf32> -> vector<2x8x8xf32>
    "tpu.trace_start"() <{level = 10 : i32, message = "bqp,bpd->bqd"}> : () -> ()
    %cst_100 = arith.constant dense<0.000000e+00> : vector<2x8x16xf32>
    %207 = tpu.matmul %206, %164, %cst_100 {dimension_numbers = #tpu.dot_dimension_numbers<[2], [1], [1], [2], [0, 0, 0, 1, 1, 2], [0], [0]>} : vector<2x8x8xf32>, vector<2x8x16xf32>, vector<2x8x16xf32> -> vector<2x8x16xf32>
    "tpu.trace_stop"() : () -> ()
    %208 = tpu.concatenate %106, %207 in 2 : vector<2x8x16xf32>, vector<2x8x16xf32> -> vector<2x8x32xf32>
    %cst_101 = arith.constant 0.000000e+00 : f32
    %209 = vector.broadcast %cst_101 : f32 to vector<2x8x32xf32>
    %210 = arith.maximumf %208, %209 : vector<2x8x32xf32>
    %c0_102 = arith.constant 0 : index
    %c0_103 = arith.constant 0 : index
    %c0_104 = arith.constant 0 : index
    %211 = vector.load %arg6[%c0_102, %c0_103, %c0_104] : memref<2x8x32xf32, #tpu.memory_space<vmem>>, vector<2x8x32xf32>
    tpu.vector_store %arg6[%c0_102, %c0_103, %c0_104], %210 {strides = array<i32>} : memref<2x8x32xf32, #tpu.memory_space<vmem>>, vector<2x8x32xf32>,
    return
  }
  func.func @transform_0(%arg0: i32) -> (i32, i32, i32) {
    %c0_i32 = arith.constant 0 : i32
    %c0_i32_0 = arith.constant 0 : i32
    %c0_i32_1 = arith.constant 0 : i32
    return %arg0, %c0_i32, %c0_i32_0 : i32, i32, i32
  }
  func.func @transform_1(%arg0: i32) -> (i32, i32, i32) {
    %c0_i32 = arith.constant 0 : i32
    %c0_i32_0 = arith.constant 0 : i32
    %c0_i32_1 = arith.constant 0 : i32
    return %arg0, %c0_i32, %c0_i32_0 : i32, i32, i32
  }
  func.func @transform_2(%arg0: i32) -> (i32, i32) {
    %c0_i32 = arith.constant 0 : i32
    %c0_i32_0 = arith.constant 0 : i32
    %c0_i32_1 = arith.constant 0 : i32
    return %c0_i32, %c0_i32_0 : i32, i32
  }
  func.func @transform_3(%arg0: i32) -> (i32, i32, i32, i32) {
    %c0_i32 = arith.constant 0 : i32
    %c0_i32_0 = arith.constant 0 : i32
    %c0_i32_1 = arith.constant 0 : i32
    %c0_i32_2 = arith.constant 0 : i32
    %c0_i32_3 = arith.constant 0 : i32
    return %c0_i32, %c0_i32_0, %c0_i32_1, %c0_i32_2 : i32, i32, i32, i32
  }
  func.func @transform_4(%arg0: i32) -> (i32, i32, i32, i32) {
    %c0_i32 = arith.constant 0 : i32
    %c0_i32_0 = arith.constant 0 : i32
    %c0_i32_1 = arith.constant 0 : i32
    %c0_i32_2 = arith.constant 0 : i32
    %c0_i32_3 = arith.constant 0 : i32
    return %c0_i32, %c0_i32_0, %c0_i32_1, %c0_i32_2 : i32, i32, i32, i32
  }
  func.func @transform_5(%arg0: i32) -> (i32, i32, i32) {
    %c0_i32 = arith.constant 0 : i32
    %c0_i32_0 = arith.constant 0 : i32
    %c0_i32_1 = arith.constant 0 : i32
    return %arg0, %c0_i32, %c0_i32_0 : i32, i32, i32
  }
}

</mosaic_0001>

<llo_original>
// kernel: tpu_custom_call.1
$region0: #{tpu_custom_call.1}
  #allocation0 [shape = 'u32[]', space=smem, size = 0x4, offset = 0x4, fixed_abs, tag = 'smem constant byte address 0x4 - core index']
  #allocation1 [shape = 'u32[144,128]{1,0:T(1,128)}', space=vmem, size = 0x12000, scoped, tag = 'internal scratch']
  %s0 = inlined_call_operand.hbm [shape: f32[2,8,32], index: 0, kind: input, shape index: {}]
  %s1 = inlined_call_operand.hbm [shape: f32[2,8,8], index: 1, kind: input, shape index: {}]
  %s2 = inlined_call_operand.hbm [shape: f32[32,96], index: 2, kind: input, shape index: {}]
  %s3 = inlined_call_operand.vmem [shape: f32[2,3,1,16], index: 3, kind: input, shape index: {}]
  %s4 = inlined_call_operand.vmem [shape: f32[2,3,1,16], index: 4, kind: input, shape index: {}]
  %s5 = inlined_call_operand.hbm [shape: f32[2,8,32], index: 5, kind: output, shape index: {}]
  %s6 = sld [smem:[#allocation0]]
  $region42: #{tpu_custom_call.1} parent=0
    _
  %s8 = ssub.s32 1, %s6
  %s9 = scalar_select 0, %s8, %s6
  $region1: #{tpu_custom_call.1} parent=0
    #allocation2 [shape = 'u8[8192]{0}', space=vmem, size = 0x2000, scoped, tag = 'input window, operand 0, single buffered']
    #allocation3 [shape = 's32[1]{0}', space=sflag, size = 0x4, scoped, tag = 'scoped memory for tpu_custom_call.1']
    #allocation4 [shape = 's32[1]{0}', space=sflag, size = 0x4, scoped, tag = 'scoped memory for tpu_custom_call.1']
    #allocation5 [shape = 'u8[8192]{0}', space=vmem, size = 0x2000, scoped, tag = 'input window, operand 1, single buffered']
    #allocation6 [shape = 's32[1]{0}', space=sflag, size = 0x4, scoped, tag = 'scoped memory for tpu_custom_call.1']
    #allocation7 [shape = 'u8[16384]{0}', space=vmem, size = 0x4000, scoped, tag = 'input window, operand 2, single buffered']
    #allocation8 [shape = 'u8[8192]{0}', space=vmem, size = 0x2000, scoped, tag = 'output window, operand 0, single buffered']
    %10 = vsyncpa [#allocation3], 0
    %11 = vsyncpa [#allocation6], 0
    %12 = vsyncpa [#allocation4], 0
    // Predicated region
    $region2: #{tpu_custom_call.1} parent=1 // pred_check
      _
    $region3: #{tpu_custom_call.1} parent=1 // pred_check_branch
      %14 = sbr.rel (0) target = $region5
    $region4: #{tpu_custom_call.1} parent=1 // pred_region
      %s16 = ssub.s32 256, 256
      %17 = vsyncadd [#allocation3], %s16
      %s18 = sshll.u32 [#allocation2], 4
      %s19 = int_to_ptr.vmem [resolvable:$true] %s18
      %24 = dma.hbm_to_vmem [thread:$0]  %s0, 256, %s19, [#allocation3], 128, 128, 8
    $region5: #{tpu_custom_call.1} parent=1 // pred_fallthru
      _
    // Predicated region
    $region6: #{tpu_custom_call.1} parent=1 // pred_check
      _
    $region7: #{tpu_custom_call.1} parent=1 // pred_check_branch
      %26 = sbr.rel (0) target = $region9
    $region8: #{tpu_custom_call.1} parent=1 // pred_region
      %s28 = ssub.s32 256, 256
      %29 = vsyncadd [#allocation6], %s28
      %s30 = sshll.u32 [#allocation5], 4
      %s31 = int_to_ptr.vmem [resolvable:$true] %s30
      %36 = dma.hbm_to_vmem [thread:$0]  %s1, 256, %s31, [#allocation6], 128, 128, 8
    $region9: #{tpu_custom_call.1} parent=1 // pred_fallthru
      _
    // Predicated region
    $region10: #{tpu_custom_call.1} parent=1 // pred_check
      _
    $region11: #{tpu_custom_call.1} parent=1 // pred_check_branch
      %38 = sbr.rel (0) target = $region13
    $region12: #{tpu_custom_call.1} parent=1 // pred_region
      %s40 = ssub.s32 512, 512
      %41 = vsyncadd [#allocation6], %s40
      %s42 = sshll.u32 [#allocation7], 4
      %s43 = int_to_ptr.vmem [resolvable:$true] %s42
      %48 = dma.hbm_to_vmem [thread:$0]  %s2, 512, %s43, [#allocation6], 128, 128, 8
    $region13: #{tpu_custom_call.1} parent=1 // pred_fallthru
      _
    // Predicated region
    $region14: #{tpu_custom_call.1} parent=1 // pred_check
      _
    $region15: #{tpu_custom_call.1} parent=1 // pred_check_branch
      %50 = sbr.rel (0) target = $region17
    $region16: #{tpu_custom_call.1} parent=1 // pred_region
      _
    $region17: #{tpu_custom_call.1} parent=1 // pred_fallthru
      _
    // Predicated region
    $region18: #{tpu_custom_call.1} parent=1 // pred_check
      _
    $region19: #{tpu_custom_call.1} parent=1 // pred_check_branch
      %52 = sbr.rel (0) target = $region21
    $region20: #{tpu_custom_call.1} parent=1 // pred_region
      _
    $region21: #{tpu_custom_call.1} parent=1 // pred_fallthru
      _
    // Predicated region
    $region22: #{tpu_custom_call.1} parent=1 // pred_check
      _
    $region23: #{tpu_custom_call.1} parent=1 // pred_check_branch
      %54 = sbr.rel (0) target = $region25
    $region24: #{tpu_custom_call.1} parent=1 // pred_region
      %55 = dma.done [#allocation3], 256
    $region25: #{tpu_custom_call.1} parent=1 // pred_fallthru
      _
    // Predicated region
    $region26: #{tpu_custom_call.1} parent=1 // pred_check
      _
    $region27: #{tpu_custom_call.1} parent=1 // pred_check_branch
      %57 = sbr.rel (0) target = $region29
    $region28: #{tpu_custom_call.1} parent=1 // pred_region
      %58 = dma.done [#allocation6], 256
    $region29: #{tpu_custom_call.1} parent=1 // pred_fallthru
      _
    // Predicated region
    $region30: #{tpu_custom_call.1} parent=1 // pred_check
      _
    $region31: #{tpu_custom_call.1} parent=1 // pred_check_branch
      %60 = sbr.rel (0) target = $region33
    $region32: #{tpu_custom_call.1} parent=1 // pred_region
      %61 = dma.done [#allocation6], 512
    $region33: #{tpu_custom_call.1} parent=1 // pred_fallthru
      _
    %v62 = vld [vmem:[#allocation2] sm:$0xff]
    %v63 = vld [vmem:[#allocation2 + $0x8] sm:$0xff]
    %v64 = vld [vmem:[#allocation5] sm:$0xff]
    %v65 = vld [vmem:[#allocation5 + $0x8] sm:$0xff]
    %v66 = vld [vmem:[#allocation7] sm:$0xff]
    %v67 = vld [vmem:[#allocation7 + $0x8] sm:$0xff]
    %v68 = vld [vmem:[#allocation7 + $0x10] sm:$0xff]
    %v69 = vld [vmem:[#allocation7 + $0x18] sm:$0xff]
    %vm70 = vcmask 261120
    %v72 = vsel %vm70, %v62, 0
    %v75 = vsel %vm70, %v63, 0
    %77 = vmatprep.subr.mxu0 0.0
    %78 = vmatpush1.msra.mxu0 %v66
    %79 = vmatprep.subr.mxu0 0.0
    %80 = vmatpush1.msra.mxu0 %v67
    %81 = vmatprep.subr.mxu0 0.0
    %82 = vmatpush1.msra.mxu0 %v68
    %83 = vmatprep.subr.mxu0 0.0
    %84 = vmatpush1.msra.mxu0 %v69
    %85 = vmatprep.subr.mxu0 0.0
    %86 = vmatpush1.msra.mxu0 0.0
    %87 = vmatprep.subr.mxu0 0.0
    %88 = vmatpush1.msra.mxu0 0.0
    %89 = vmatprep.subr.mxu0 0.0
    %90 = vmatpush1.msra.mxu0 0.0
    %91 = vmatprep.subr.mxu0 0.0
    %92 = vmatpush1.msra.mxu0 0.0
    %93 = vmatprep.subr.mxu0 0.0
    %94 = vmatpush1.msra.mxu0 0.0
    %95 = vmatprep.subr.mxu0 0.0
    %96 = vmatpush1.msra.mxu0 0.0
    %97 = vmatprep.subr.mxu0 0.0
    %98 = vmatpush1.msra.mxu0 0.0
    %99 = vmatprep.subr.mxu0 0.0
    %100 = vmatpush1.msra.mxu0 0.0
    %101 = vmatprep.subr.mxu0 0.0
    %102 = vmatpush1.msra.mxu0 0.0
    %103 = vmatprep.subr.mxu0 0.0
    %104 = vmatpush1.msra.mxu0 0.0
    %105 = vmatprep.subr.mxu0 0.0
    %106 = vmatpush1.msra.mxu0 0.0
    %107 = vmatprep.subr.mxu0 0.0
    %108 = vmatpush1.msra.mxu0 0.0
    %109 = vmatprep.subr.mxu0 0.0
    %110 = vmatpush1.msra.mxu0 0.0
    %111 = vmatprep.subr.mxu0 0.0
    %112 = vmatpush1.msra.mxu0 0.0
    %113 = vmatprep.subr.mxu0 0.0
    %114 = vmatpush1.msra.mxu0 0.0
    %115 = vmatprep.subr.mxu0 0.0
    %116 = vmatpush1.msra.mxu0 0.0
    %117 = vmatprep.subr.mxu0 0.0
    %118 = vmatpush1.msra.mxu0 0.0
    %119 = vmatprep.subr.mxu0 0.0
    %120 = vmatpush1.msra.mxu0 0.0
    %121 = vmatprep.subr.mxu0 0.0
    %122 = vmatpush1.msra.mxu0 0.0
    %123 = vmatprep.subr.mxu0 0.0
    %124 = vmatpush1.msra.mxu0 0.0
    %125 = vmatprep.subr.mxu0 0.0
    %126 = vmatpush1.msra.mxu0 0.0
    %127 = vmatprep.subr.mxu0 0.0
    %128 = vmatpush1.msra.mxu0 0.0
    %129 = vmatprep.subr.mxu0 0.0
    %130 = vmatpush1.msra.mxu0 0.0
    %131 = vmatprep.subr.mxu0 0.0
    %132 = vmatpush1.msra.mxu0 0.0
    %133 = vmatprep.subr.mxu0 0.0
    %134 = vmatpush1.msra.mxu0 0.0
    %135 = vmatprep.subr.mxu0 0.0
    %136 = vmatpush1.msra.mxu0 0.0
    %137 = vmatprep.subr.mxu0 0.0
    %138 = vmatpush1.msra.mxu0 0.0
    %139 = vmatprep.subr.mxu0 0.0
    %140 = vmatpush1.msra.mxu0 0.0
    %141 = vmatprep.mubr.f32.mxu0 0.0
    %142 = vmatmul.mubr.f32.gmra.mrb[0].mxu0 %v72
    %v143 = vpop.f32.mrb[0].mxu0
    %v144 = vadd.f32 0.0, %v143
    %v145 = vpop.f32.mrb[0].mxu0
    %146 = vmatprep.mubr.f32.mxu0 0.0
    %147 = vmatmul.mubr.f32.gmra.mrb[0].mxu0 %v75
    %v148 = vpop.f32.mrb[0].mxu0
    %v149 = vadd.f32 0.0, %v148
    %v150 = vpop.f32.mrb[0].mxu0
    %151 = vdwg.mxu0
    %v152 = vld [vmem:[%s3] sm:$0x1]
    %v153 = vld [vmem:[%s4] sm:$0x1]
    %v155 = vlaneseq
    %v156 = vshrl.u32 %v155, 7
    %v157 = vsub.s32 0, %v156
    %v158 = vrot.slane %v152, %v157
    %v160 = vmul.f32 %v144, %v158
    %v161 = vmul.f32 %v149, %v158
    %vm162 = vcmask 130048
    %v163 = vsel %vm162, %v160, 0.0
    %164 = vadd.xlane.f32.xlu0 %v163
    %v165 = vpop.xlane.xlu0 %164
    %v166 = vsel %vm162, %v161, 0.0
    %167 = vadd.xlane.f32.xlu0 %v166
    %v168 = vpop.xlane.xlu0 %167
    %v170 = vlaneseq
    %v171 = vshrl.u32 %v170, 7
    %v172 = vsub.s32 0, %v171
    %v173 = vrot.slane %v153, %v172
    %v175 = vmul.f32 %v144, %v173
    %v176 = vmul.f32 %v149, %v173
    %v177 = vsel %vm162, %v175, 0.0
    %178 = vadd.xlane.f32.xlu0 %v177
    %v179 = vpop.xlane.xlu0 %178
    %v180 = vsel %vm162, %v176, 0.0
    %181 = vadd.xlane.f32.xlu0 %v180
    %v182 = vpop.xlane.xlu0 %181
    %v185 = vlaneseq
    %v186 = vand.u32 %v185, 127
    %v187 = vlaneseq
    %v188 = vshrl.u32 %v187, 7
    %v189 = vsub.s32 %v186, %v188
    %v190 = vrot.slane %v179, %v189
    %v191 = vlaneseq
    %v192 = vshrl.u32 %v191, 7
    %v193 = vsub.s32 %v186, %v192
    %v194 = vrot.slane %v182, %v193
    %vm195 = vcmask 1042434
    %v196 = vsel %vm195, %v190, %v190
    %vm197 = vcmask 1043459
    %v198 = vsel %vm197, %v190, %v196
    %vm199 = vcmask 1044484
    %v200 = vsel %vm199, %v190, %v198
    %vm201 = vcmask 1045509
    %v202 = vsel %vm201, %v190, %v200
    %vm203 = vcmask 1046534
    %v204 = vsel %vm203, %v190, %v202
    %vm205 = vcmask 1047559
    %v206 = vsel %vm205, %v190, %v204
    %v207 = vsel %vm195, %v194, %v194
    %v208 = vsel %vm197, %v194, %v207
    %v209 = vsel %vm199, %v194, %v208
    %v210 = vsel %vm201, %v194, %v209
    %v211 = vsel %vm203, %v194, %v210
    %v212 = vsel %vm205, %v194, %v211
    %v215 = vadd.f32 %v165, %v206
    %v216 = vadd.f32 %v168, %v212
    %vm217 = vcmp.gt.f32.partialorder %v215, 0.0
    %vm218 = vcmp.gt.f32.partialorder %v216, 0.0
    %v219 = vmul.f32 %v215, 0.2
    %v220 = vmul.f32 %v216, 0.2
    %v221 = vsel %vm217, %v215, %v219
    %v222 = vsel %vm218, %v216, %v220
    %vm223 = vcmp.eq.f32.partialorder %v64, 1.0
    %vm224 = vcmp.eq.f32.partialorder %v65, 1.0
    %v225 = vsel %vm223, %v221, 0.0
    %v226 = vsel %vm224, %v222, 0.0
    %v227 = vadd.f32 %v225, 0.0
    %v228 = vadd.f32 %v226, 0.0
    %s229 = scalar_lea.vmem %s3, 1
    %v230 = vld [vmem:[%s229] sm:$0x1]
    %s231 = scalar_lea.vmem %s4, 1
    %v232 = vld [vmem:[%s231] sm:$0x1]
    %v234 = vlaneseq
    %v235 = vshrl.u32 %v234, 7
    %v236 = vsub.s32 0, %v235
    %v237 = vrot.slane %v230, %v236
    %238 = vrot.lane.b32.xlu0 %v237, 16
    %v239 = vpop.permute.xlu0 %238
    %v241 = vmul.f32 %v144, %v239
    %v242 = vmul.f32 %v149, %v239
    %245 = vrot.lane.b32.xlu0 %v241, 112
    %v246 = vpop.permute.xlu0 %245
    %247 = vrot.lane.b32.xlu0 %v242, 112
    %v248 = vpop.permute.xlu0 %247
    %v251 = vsel %vm162, %v246, 0.0
    %252 = vadd.xlane.f32.xlu0 %v251
    %v253 = vpop.xlane.xlu0 %252
    %v254 = vsel %vm162, %v248, 0.0
    %255 = vadd.xlane.f32.xlu0 %v254
    %v256 = vpop.xlane.xlu0 %255
    %v258 = vlaneseq
    %v259 = vshrl.u32 %v258, 7
    %v260 = vsub.s32 0, %v259
    %v261 = vrot.slane %v232, %v260
    %262 = vrot.lane.b32.xlu0 %v261, 16
    %v263 = vpop.permute.xlu0 %262
    %v265 = vmul.f32 %v144, %v263
    %v266 = vmul.f32 %v149, %v263
    %269 = vrot.lane.b32.xlu0 %v265, 112
    %v270 = vpop.permute.xlu0 %269
    %271 = vrot.lane.b32.xlu0 %v266, 112
    %v272 = vpop.permute.xlu0 %271
    %v275 = vsel %vm162, %v270, 0.0
    %276 = vadd.xlane.f32.xlu0 %v275
    %v277 = vpop.xlane.xlu0 %276
    %v278 = vsel %vm162, %v272, 0.0
    %279 = vadd.xlane.f32.xlu0 %v278
    %v280 = vpop.xlane.xlu0 %279
    %v283 = vlaneseq
    %v284 = vshrl.u32 %v283, 7
    %v285 = vsub.s32 %v186, %v284
    %v286 = vrot.slane %v277, %v285
    %v287 = vlaneseq
    %v288 = vshrl.u32 %v287, 7
    %v289 = vsub.s32 %v186, %v288
    %v290 = vrot.slane %v280, %v289
    %v291 = vsel %vm195, %v286, %v286
    %v292 = vsel %vm197, %v286, %v291
    %v293 = vsel %vm199, %v286, %v292
    %v294 = vsel %vm201, %v286, %v293
    %v295 = vsel %vm203, %v286, %v294
    %v296 = vsel %vm205, %v286, %v295
    %v297 = vsel %vm195, %v290, %v290
    %v298 = vsel %vm197, %v290, %v297
    %v299 = vsel %vm199, %v290, %v298
    %v300 = vsel %vm201, %v290, %v299
    %v301 = vsel %vm203, %v290, %v300
    %v302 = vsel %vm205, %v290, %v301
    %v305 = vadd.f32 %v253, %v296
    %v306 = vadd.f32 %v256, %v302
    %vm307 = vcmp.gt.f32.partialorder %v305, 0.0
    %vm308 = vcmp.gt.f32.partialorder %v306, 0.0
    %v309 = vmul.f32 %v305, 0.2
    %v310 = vmul.f32 %v306, 0.2
    %v311 = vsel %vm307, %v305, %v309
    %v312 = vsel %vm308, %v306, %v310
    %vm313 = vcmp.eq.f32.partialorder %v64, 2.0
    %vm314 = vcmp.eq.f32.partialorder %v65, 2.0
    %v315 = vsel %vm313, %v311, 0.0
    %v316 = vsel %vm314, %v312, 0.0
    %v317 = vadd.f32 %v227, %v315
    %v318 = vadd.f32 %v228, %v316
    %s319 = scalar_lea.vmem %s3, 2
    %v320 = vld [vmem:[%s319] sm:$0x1]
    %s321 = scalar_lea.vmem %s4, 2
    %v322 = vld [vmem:[%s321] sm:$0x1]
    %v324 = vlaneseq
    %v325 = vshrl.u32 %v324, 7
    %v326 = vsub.s32 0, %v325
    %v327 = vrot.slane %v320, %v326
    %328 = vrot.lane.b32.xlu0 %v327, 32
    %v329 = vpop.permute.xlu0 %328
    %v331 = vmul.f32 %v144, %v329
    %v332 = vmul.f32 %v149, %v329
    %335 = vrot.lane.b32.xlu0 %v331, 96
    %v336 = vpop.permute.xlu0 %335
    %337 = vrot.lane.b32.xlu0 %v332, 96
    %v338 = vpop.permute.xlu0 %337
    %v341 = vsel %vm162, %v336, 0.0
    %342 = vadd.xlane.f32.xlu0 %v341
    %v343 = vpop.xlane.xlu0 %342
    %v344 = vsel %vm162, %v338, 0.0
    %345 = vadd.xlane.f32.xlu0 %v344
    %v346 = vpop.xlane.xlu0 %345
    %v348 = vlaneseq
    %v349 = vshrl.u32 %v348, 7
    %v350 = vsub.s32 0, %v349
    %v351 = vrot.slane %v322, %v350
    %352 = vrot.lane.b32.xlu0 %v351, 32
    %v353 = vpop.permute.xlu0 %352
    %v355 = vmul.f32 %v144, %v353
    %v356 = vmul.f32 %v149, %v353
    %359 = vrot.lane.b32.xlu0 %v355, 96
    %v360 = vpop.permute.xlu0 %359
    %361 = vrot.lane.b32.xlu0 %v356, 96
    %v362 = vpop.permute.xlu0 %361
    %v365 = vsel %vm162, %v360, 0.0
    %366 = vadd.xlane.f32.xlu0 %v365
    %v367 = vpop.xlane.xlu0 %366
    %v368 = vsel %vm162, %v362, 0.0
    %369 = vadd.xlane.f32.xlu0 %v368
    %v370 = vpop.xlane.xlu0 %369
    %v373 = vlaneseq
    %v374 = vshrl.u32 %v373, 7
    %v375 = vsub.s32 %v186, %v374
    %v376 = vrot.slane %v367, %v375
    %v377 = vlaneseq
    %v378 = vshrl.u32 %v377, 7
    %v379 = vsub.s32 %v186, %v378
    %v380 = vrot.slane %v370, %v379
    %v381 = vsel %vm195, %v376, %v376
    %v382 = vsel %vm197, %v376, %v381
    %v383 = vsel %vm199, %v376, %v382
    %v384 = vsel %vm201, %v376, %v383
    %v385 = vsel %vm203, %v376, %v384
    %v386 = vsel %vm205, %v376, %v385
    %v387 = vsel %vm195, %v380, %v380
    %v388 = vsel %vm197, %v380, %v387
    %v389 = vsel %vm199, %v380, %v388
    %v390 = vsel %vm201, %v380, %v389
    %v391 = vsel %vm203, %v380, %v390
    %v392 = vsel %vm205, %v380, %v391
    %v395 = vadd.f32 %v343, %v386
    %v396 = vadd.f32 %v346, %v392
    %vm397 = vcmp.gt.f32.partialorder %v395, 0.0
    %vm398 = vcmp.gt.f32.partialorder %v396, 0.0
    %v399 = vmul.f32 %v395, 0.2
    %v400 = vmul.f32 %v396, 0.2
    %v401 = vsel %vm397, %v395, %v399
    %v402 = vsel %vm398, %v396, %v400
    %vm403 = vcmp.eq.f32.partialorder %v64, 3.0
    %vm404 = vcmp.eq.f32.partialorder %v65, 3.0
    %v405 = vsel %vm403, %v401, 0.0
    %v406 = vsel %vm404, %v402, 0.0
    %v407 = vadd.f32 %v317, %v405
    %v408 = vadd.f32 %v318, %v406
    %vm409 = vcmp.gt.f32.partialorder %v64, 0.0
    %vm410 = vcmp.gt.f32.partialorder %v65, 0.0
    %v411 = vsel %vm409, %v407, -1e+30
    %v412 = vsel %vm410, %v408, -1e+30
    %vm413 = vcmask 64512
    %v414 = vsel %vm413, %v411, -inf
    %415 = vmax.xlane.f32.xlu0 %v414
    %v416 = vpop.xlane.xlu0 %415
    %v417 = vsel %vm413, %v412, -inf
    %418 = vmax.xlane.f32.xlu0 %v417
    %v419 = vpop.xlane.xlu0 %418
    %v420 = vsub.f32 %v411, %v416
    %v421 = vsub.f32 %v412, %v419
    %v422 = vmul.f32 %v420, 1.442695
    %v423 = vpow.pop %v422
    %v424 = vmul.f32 %v421, 1.442695
    %v425 = vpow.pop %v424
    %v426 = vsel %vm413, %v423, 0.0
    %427 = vadd.xlane.f32.xlu0 %v426
    %v428 = vpop.xlane.xlu0 %427
    %v429 = vsel %vm413, %v425, 0.0
    %430 = vadd.xlane.f32.xlu0 %v429
    %v431 = vpop.xlane.xlu0 %430
    %v432 = vrcp.pop %v428
    %v433 = vrcp.pop %v431
    %v434 = vmul.f32 %v423, %v432
    %v435 = vmul.f32 %v425, %v433
    %436 = vxpose.xlu0.b32.start [1/16] %v434, 128
    %437 = vxpose.xlu0.b32.cont [2/16] 0.0, 128
    %438 = vxpose.xlu0.b32.cont [3/16] 0.0, 128
    %439 = vxpose.xlu0.b32.cont [4/16] 0.0, 128
    %440 = vxpose.xlu0.b32.cont [5/16] 0.0, 128
    %441 = vxpose.xlu0.b32.cont [6/16] 0.0, 128
    %442 = vxpose.xlu0.b32.cont [7/16] 0.0, 128
    %443 = vxpose.xlu0.b32.cont [8/16] 0.0, 128
    %444 = vxpose.xlu0.b32.cont [9/16] 0.0, 128
    %445 = vxpose.xlu0.b32.cont [10/16] 0.0, 128
    %446 = vxpose.xlu0.b32.cont [11/16] 0.0, 128
    %447 = vxpose.xlu0.b32.cont [12/16] 0.0, 128
    %448 = vxpose.xlu0.b32.cont [13/16] 0.0, 128
    %449 = vxpose.xlu0.b32.cont [14/16] 0.0, 128
    %450 = vxpose.xlu0.b32.cont [15/16] 0.0, 128
    %451 = vxpose.xlu0.b32.end [16/16] 0.0, 128
    %v452 = vpop.trf.xlu0
    %v453 = vpop.trf.xlu0
    %v454 = vpop.trf.xlu0
    %v455 = vpop.trf.xlu0
    %v456 = vpop.trf.xlu0
    %v457 = vpop.trf.xlu0
    %v458 = vpop.trf.xlu0
    %v459 = vpop.trf.xlu0
    %v460 = vpop.trf.xlu0
    %v461 = vpop.trf.xlu0
    %v462 = vpop.trf.xlu0
    %v463 = vpop.trf.xlu0
    %v464 = vpop.trf.xlu0
    %v465 = vpop.trf.xlu0
    %v466 = vpop.trf.xlu0
    %v467 = vpop.trf.xlu0
    %468 = vxpose.xlu0.b32.start [1/16] %v435, 128
    %469 = vxpose.xlu0.b32.cont [2/16] 0.0, 128
    %470 = vxpose.xlu0.b32.cont [3/16] 0.0, 128
    %471 = vxpose.xlu0.b32.cont [4/16] 0.0, 128
    %472 = vxpose.xlu0.b32.cont [5/16] 0.0, 128
    %473 = vxpose.xlu0.b32.cont [6/16] 0.0, 128
    %474 = vxpose.xlu0.b32.cont [7/16] 0.0, 128
    %475 = vxpose.xlu0.b32.cont [8/16] 0.0, 128
    %476 = vxpose.xlu0.b32.cont [9/16] 0.0, 128
    %477 = vxpose.xlu0.b32.cont [10/16] 0.0, 128
    %478 = vxpose.xlu0.b32.cont [11/16] 0.0, 128
    %479 = vxpose.xlu0.b32.cont [12/16] 0.0, 128
    %480 = vxpose.xlu0.b32.cont [13/16] 0.0, 128
    %481 = vxpose.xlu0.b32.cont [14/16] 0.0, 128
    %482 = vxpose.xlu0.b32.cont [15/16] 0.0, 128
    %483 = vxpose.xlu0.b32.end [16/16] 0.0, 128
    %v484 = vpop.trf.xlu0
    %v485 = vpop.trf.xlu0
    %v486 = vpop.trf.xlu0
    %v487 = vpop.trf.xlu0
    %v488 = vpop.trf.xlu0
    %v489 = vpop.trf.xlu0
    %v490 = vpop.trf.xlu0
    %v491 = vpop.trf.xlu0
    %v492 = vpop.trf.xlu0
    %v493 = vpop.trf.xlu0
    %v494 = vpop.trf.xlu0
    %v495 = vpop.trf.xlu0
    %v496 = vpop.trf.xlu0
    %v497 = vpop.trf.xlu0
    %v498 = vpop.trf.xlu0
    %v499 = vpop.trf.xlu0
    %501 = vrot.lane.b32.xlu0 %v144, 96
    %v502 = vpop.permute.xlu0 %501
    %v505 = vsel %vm413, %v452, 0
    %507 = vmatprep.subr.mxu0 0.0
    %508 = vmatpush1.msra.mxu0 %v502
    %509 = vmatprep.subr.mxu0 0.0
    %510 = vmatpush1.msra.mxu0 0.0
    %511 = vmatprep.subr.mxu0 0.0
    %512 = vmatpush1.msra.mxu0 0.0
    %513 = vmatprep.subr.mxu0 0.0
    %514 = vmatpush1.msra.mxu0 0.0
    %515 = vmatprep.subr.mxu0 0.0
    %516 = vmatpush1.msra.mxu0 0.0
    %517 = vmatprep.subr.mxu0 0.0
    %518 = vmatpush1.msra.mxu0 0.0
    %519 = vmatprep.subr.mxu0 0.0
    %520 = vmatpush1.msra.mxu0 0.0
    %521 = vmatprep.subr.mxu0 0.0
    %522 = vmatpush1.msra.mxu0 0.0
    %523 = vmatprep.subr.mxu0 0.0
    %524 = vmatpush1.msra.mxu0 0.0
    %525 = vmatprep.subr.mxu0 0.0
    %526 = vmatpush1.msra.mxu0 0.0
    %527 = vmatprep.subr.mxu0 0.0
    %528 = vmatpush1.msra.mxu0 0.0
    %529 = vmatprep.subr.mxu0 0.0
    %530 = vmatpush1.msra.mxu0 0.0
    %531 = vmatprep.subr.mxu0 0.0
    %532 = vmatpush1.msra.mxu0 0.0
    %533 = vmatprep.subr.mxu0 0.0
    %534 = vmatpush1.msra.mxu0 0.0
    %535 = vmatprep.subr.mxu0 0.0
    %536 = vmatpush1.msra.mxu0 0.0
    %537 = vmatprep.subr.mxu0 0.0
    %538 = vmatpush1.msra.mxu0 0.0
    %539 = vmatprep.subr.mxu0 0.0
    %540 = vmatpush1.msra.mxu0 0.0
    %541 = vmatprep.subr.mxu0 0.0
    %542 = vmatpush1.msra.mxu0 0.0
    %543 = vmatprep.subr.mxu0 0.0
    %544 = vmatpush1.msra.mxu0 0.0
    %545 = vmatprep.subr.mxu0 0.0
    %546 = vmatpush1.msra.mxu0 0.0
    %547 = vmatprep.subr.mxu0 0.0
    %548 = vmatpush1.msra.mxu0 0.0
    %549 = vmatprep.subr.mxu0 0.0
    %550 = vmatpush1.msra.mxu0 0.0
    %551 = vmatprep.subr.mxu0 0.0
    %552 = vmatpush1.msra.mxu0 0.0
    %553 = vmatprep.subr.mxu0 0.0
    %554 = vmatpush1.msra.mxu0 0.0
    %555 = vmatprep.subr.mxu0 0.0
    %556 = vmatpush1.msra.mxu0 0.0
    %557 = vmatprep.subr.mxu0 0.0
    %558 = vmatpush1.msra.mxu0 0.0
    %559 = vmatprep.subr.mxu0 0.0
    %560 = vmatpush1.msra.mxu0 0.0
    %561 = vmatprep.subr.mxu0 0.0
    %562 = vmatpush1.msra.mxu0 0.0
    %563 = vmatprep.subr.mxu0 0.0
    %564 = vmatpush1.msra.mxu0 0.0
    %565 = vmatprep.subr.mxu0 0.0
    %566 = vmatpush1.msra.mxu0 0.0
    %567 = vmatprep.subr.mxu0 0.0
    %568 = vmatpush1.msra.mxu0 0.0
    %569 = vmatprep.subr.mxu0 0.0
    %570 = vmatpush1.msra.mxu0 0.0
    %571 = vmatprep.mubr.f32.mxu0 0.0
    %572 = vmatmul.mubr.f32.gmra.mrb[0].mxu0 %v505
    %v573 = vpop.f32.mrb[0].mxu0
    %v574 = vadd.f32 0.0, %v573
    %v575 = vpop.f32.mrb[0].mxu0
    %576 = vdwg.mxu0
    %578 = vrot.lane.b32.xlu0 %v149, 96
    %v579 = vpop.permute.xlu0 %578
    %v582 = vsel %vm413, %v484, 0
    %584 = vmatprep.subr.mxu0 0.0
    %585 = vmatpush1.msra.mxu0 %v579
    %586 = vmatprep.subr.mxu0 0.0
    %587 = vmatpush1.msra.mxu0 0.0
    %588 = vmatprep.subr.mxu0 0.0
    %589 = vmatpush1.msra.mxu0 0.0
    %590 = vmatprep.subr.mxu0 0.0
    %591 = vmatpush1.msra.mxu0 0.0
    %592 = vmatprep.subr.mxu0 0.0
    %593 = vmatpush1.msra.mxu0 0.0
    %594 = vmatprep.subr.mxu0 0.0
    %595 = vmatpush1.msra.mxu0 0.0
    %596 = vmatprep.subr.mxu0 0.0
    %597 = vmatpush1.msra.mxu0 0.0
    %598 = vmatprep.subr.mxu0 0.0
    %599 = vmatpush1.msra.mxu0 0.0
    %600 = vmatprep.subr.mxu0 0.0
    %601 = vmatpush1.msra.mxu0 0.0
    %602 = vmatprep.subr.mxu0 0.0
    %603 = vmatpush1.msra.mxu0 0.0
    %604 = vmatprep.subr.mxu0 0.0
    %605 = vmatpush1.msra.mxu0 0.0
    %606 = vmatprep.subr.mxu0 0.0
    %607 = vmatpush1.msra.mxu0 0.0
    %608 = vmatprep.subr.mxu0 0.0
    %609 = vmatpush1.msra.mxu0 0.0
    %610 = vmatprep.subr.mxu0 0.0
    %611 = vmatpush1.msra.mxu0 0.0
    %612 = vmatprep.subr.mxu0 0.0
    %613 = vmatpush1.msra.mxu0 0.0
    %614 = vmatprep.subr.mxu0 0.0
    %615 = vmatpush1.msra.mxu0 0.0
    %616 = vmatprep.subr.mxu0 0.0
    %617 = vmatpush1.msra.mxu0 0.0
    %618 = vmatprep.subr.mxu0 0.0
    %619 = vmatpush1.msra.mxu0 0.0
    %620 = vmatprep.subr.mxu0 0.0
    %621 = vmatpush1.msra.mxu0 0.0
    %622 = vmatprep.subr.mxu0 0.0
    %623 = vmatpush1.msra.mxu0 0.0
    %624 = vmatprep.subr.mxu0 0.0
    %625 = vmatpush1.msra.mxu0 0.0
    %626 = vmatprep.subr.mxu0 0.0
    %627 = vmatpush1.msra.mxu0 0.0
    %628 = vmatprep.subr.mxu0 0.0
    %629 = vmatpush1.msra.mxu0 0.0
    %630 = vmatprep.subr.mxu0 0.0
    %631 = vmatpush1.msra.mxu0 0.0
    %632 = vmatprep.subr.mxu0 0.0
    %633 = vmatpush1.msra.mxu0 0.0
    %634 = vmatprep.subr.mxu0 0.0
    %635 = vmatpush1.msra.mxu0 0.0
    %636 = vmatprep.subr.mxu0 0.0
    %637 = vmatpush1.msra.mxu0 0.0
    %638 = vmatprep.subr.mxu0 0.0
    %639 = vmatpush1.msra.mxu0 0.0
    %640 = vmatprep.subr.mxu0 0.0
    %641 = vmatpush1.msra.mxu0 0.0
    %642 = vmatprep.subr.mxu0 0.0
    %643 = vmatpush1.msra.mxu0 0.0
    %644 = vmatprep.subr.mxu0 0.0
    %645 = vmatpush1.msra.mxu0 0.0
    %646 = vmatprep.subr.mxu0 0.0
    %647 = vmatpush1.msra.mxu0 0.0
    %648 = vmatprep.mubr.f32.mxu0 0.0
    %649 = vmatmul.mubr.f32.gmra.mrb[0].mxu0 %v582
    %v650 = vpop.f32.mrb[0].mxu0
    %v651 = vadd.f32 0.0, %v650
    %v652 = vpop.f32.mrb[0].mxu0
    %653 = vdwg.mxu0
    %s654 = scalar_lea.vmem %s3, 3
    %v655 = vld [vmem:[%s654] sm:$0x1]
    %s656 = scalar_lea.vmem %s4, 3
    %v657 = vld [vmem:[%s656] sm:$0x1]
    %v659 = vlaneseq
    %v660 = vshrl.u32 %v659, 7
    %v661 = vsub.s32 0, %v660
    %v662 = vrot.slane %v655, %v661
    %663 = vrot.lane.b32.xlu0 %v662, 48
    %v664 = vpop.permute.xlu0 %663
    %v666 = vmul.f32 %v144, %v664
    %v667 = vmul.f32 %v149, %v664
    %670 = vrot.lane.b32.xlu0 %v666, 80
    %v671 = vpop.permute.xlu0 %670
    %672 = vrot.lane.b32.xlu0 %v667, 80
    %v673 = vpop.permute.xlu0 %672
    %v676 = vsel %vm162, %v671, 0.0
    %677 = vadd.xlane.f32.xlu0 %v676
    %v678 = vpop.xlane.xlu0 %677
    %v679 = vsel %vm162, %v673, 0.0
    %680 = vadd.xlane.f32.xlu0 %v679
    %v681 = vpop.xlane.xlu0 %680
    %v683 = vlaneseq
    %v684 = vshrl.u32 %v683, 7
    %v685 = vsub.s32 0, %v684
    %v686 = vrot.slane %v657, %v685
    %687 = vrot.lane.b32.xlu0 %v686, 48
    %v688 = vpop.permute.xlu0 %687
    %v690 = vmul.f32 %v144, %v688
    %v691 = vmul.f32 %v149, %v688
    %694 = vrot.lane.b32.xlu0 %v690, 80
    %v695 = vpop.permute.xlu0 %694
    %696 = vrot.lane.b32.xlu0 %v691, 80
    %v697 = vpop.permute.xlu0 %696
    %v700 = vsel %vm162, %v695, 0.0
    %701 = vadd.xlane.f32.xlu0 %v700
    %v702 = vpop.xlane.xlu0 %701
    %v703 = vsel %vm162, %v697, 0.0
    %704 = vadd.xlane.f32.xlu0 %v703
    %v705 = vpop.xlane.xlu0 %704
    %v708 = vlaneseq
    %v709 = vshrl.u32 %v708, 7
    %v710 = vsub.s32 %v186, %v709
    %v711 = vrot.slane %v702, %v710
    %v712 = vlaneseq
    %v713 = vshrl.u32 %v712, 7
    %v714 = vsub.s32 %v186, %v713
    %v715 = vrot.slane %v705, %v714
    %v716 = vsel %vm195, %v711, %v711
    %v717 = vsel %vm197, %v711, %v716
    %v718 = vsel %vm199, %v711, %v717
    %v719 = vsel %vm201, %v711, %v718
    %v720 = vsel %vm203, %v711, %v719
    %v721 = vsel %vm205, %v711, %v720
    %v722 = vsel %vm195, %v715, %v715
    %v723 = vsel %vm197, %v715, %v722
    %v724 = vsel %vm199, %v715, %v723
    %v725 = vsel %vm201, %v715, %v724
    %v726 = vsel %vm203, %v715, %v725
    %v727 = vsel %vm205, %v715, %v726
    %v730 = vadd.f32 %v678, %v721
    %v731 = vadd.f32 %v681, %v727
    %vm732 = vcmp.gt.f32.partialorder %v730, 0.0
    %vm733 = vcmp.gt.f32.partialorder %v731, 0.0
    %v734 = vmul.f32 %v730, 0.2
    %v735 = vmul.f32 %v731, 0.2
    %v736 = vsel %vm732, %v730, %v734
    %v737 = vsel %vm733, %v731, %v735
    %v738 = vsel %vm223, %v736, 0.0
    %v739 = vsel %vm224, %v737, 0.0
    %v740 = vadd.f32 %v738, 0.0
    %v741 = vadd.f32 %v739, 0.0
    %s742 = scalar_lea.vmem %s3, 4
    %v743 = vld [vmem:[%s742] sm:$0x1]
    %s744 = scalar_lea.vmem %s4, 4
    %v745 = vld [vmem:[%s744] sm:$0x1]
    %v747 = vlaneseq
    %v748 = vshrl.u32 %v747, 7
    %v749 = vsub.s32 0, %v748
    %v750 = vrot.slane %v743, %v749
    %751 = vrot.lane.b32.xlu0 %v750, 64
    %v752 = vpop.permute.xlu0 %751
    %v754 = vmul.f32 %v144, %v752
    %v755 = vmul.f32 %v149, %v752
    %758 = vrot.lane.b32.xlu0 %v754, 64
    %v759 = vpop.permute.xlu0 %758
    %760 = vrot.lane.b32.xlu0 %v755, 64
    %v761 = vpop.permute.xlu0 %760
    %v764 = vsel %vm162, %v759, 0.0
    %765 = vadd.xlane.f32.xlu0 %v764
    %v766 = vpop.xlane.xlu0 %765
    %v767 = vsel %vm162, %v761, 0.0
    %768 = vadd.xlane.f32.xlu0 %v767
    %v769 = vpop.xlane.xlu0 %768
    %v771 = vlaneseq
    %v772 = vshrl.u32 %v771, 7
    %v773 = vsub.s32 0, %v772
    %v774 = vrot.slane %v745, %v773
    %775 = vrot.lane.b32.xlu0 %v774, 64
    %v776 = vpop.permute.xlu0 %775
    %v778 = vmul.f32 %v144, %v776
    %v779 = vmul.f32 %v149, %v776
    %782 = vrot.lane.b32.xlu0 %v778, 64
    %v783 = vpop.permute.xlu0 %782
    %784 = vrot.lane.b32.xlu0 %v779, 64
    %v785 = vpop.permute.xlu0 %784
    %v788 = vsel %vm162, %v783, 0.0
    %789 = vadd.xlane.f32.xlu0 %v788
    %v790 = vpop.xlane.xlu0 %789
    %v791 = vsel %vm162, %v785, 0.0
    %792 = vadd.xlane.f32.xlu0 %v791
    %v793 = vpop.xlane.xlu0 %792
    %v796 = vlaneseq
    %v797 = vshrl.u32 %v796, 7
    %v798 = vsub.s32 %v186, %v797
    %v799 = vrot.slane %v790, %v798
    %v800 = vlaneseq
    %v801 = vshrl.u32 %v800, 7
    %v802 = vsub.s32 %v186, %v801
    %v803 = vrot.slane %v793, %v802
    %v804 = vsel %vm195, %v799, %v799
    %v805 = vsel %vm197, %v799, %v804
    %v806 = vsel %vm199, %v799, %v805
    %v807 = vsel %vm201, %v799, %v806
    %v808 = vsel %vm203, %v799, %v807
    %v809 = vsel %vm205, %v799, %v808
    %v810 = vsel %vm195, %v803, %v803
    %v811 = vsel %vm197, %v803, %v810
    %v812 = vsel %vm199, %v803, %v811
    %v813 = vsel %vm201, %v803, %v812
    %v814 = vsel %vm203, %v803, %v813
    %v815 = vsel %vm205, %v803, %v814
    %v818 = vadd.f32 %v766, %v809
    %v819 = vadd.f32 %v769, %v815
    %vm820 = vcmp.gt.f32.partialorder %v818, 0.0
    %vm821 = vcmp.gt.f32.partialorder %v819, 0.0
    %v822 = vmul.f32 %v818, 0.2
    %v823 = vmul.f32 %v819, 0.2
    %v824 = vsel %vm820, %v818, %v822
    %v825 = vsel %vm821, %v819, %v823
    %v826 = vsel %vm313, %v824, 0.0
    %v827 = vsel %vm314, %v825, 0.0
    %v828 = vadd.f32 %v740, %v826
    %v829 = vadd.f32 %v741, %v827
    %s830 = scalar_lea.vmem %s3, 5
    %v831 = vld [vmem:[%s830] sm:$0x1]
    %s832 = scalar_lea.vmem %s4, 5
    %v833 = vld [vmem:[%s832] sm:$0x1]
    %v835 = vlaneseq
    %v836 = vshrl.u32 %v835, 7
    %v837 = vsub.s32 0, %v836
    %v838 = vrot.slane %v831, %v837
    %839 = vrot.lane.b32.xlu0 %v838, 80
    %v840 = vpop.permute.xlu0 %839
    %v842 = vmul.f32 %v144, %v840
    %v843 = vmul.f32 %v149, %v840
    %846 = vrot.lane.b32.xlu0 %v842, 48
    %v847 = vpop.permute.xlu0 %846
    %848 = vrot.lane.b32.xlu0 %v843, 48
    %v849 = vpop.permute.xlu0 %848
    %v852 = vsel %vm162, %v847, 0.0
    %853 = vadd.xlane.f32.xlu0 %v852
    %v854 = vpop.xlane.xlu0 %853
    %v855 = vsel %vm162, %v849, 0.0
    %856 = vadd.xlane.f32.xlu0 %v855
    %v857 = vpop.xlane.xlu0 %856
    %v859 = vlaneseq
    %v860 = vshrl.u32 %v859, 7
    %v861 = vsub.s32 0, %v860
    %v862 = vrot.slane %v833, %v861
    %863 = vrot.lane.b32.xlu0 %v862, 80
    %v864 = vpop.permute.xlu0 %863
    %v866 = vmul.f32 %v144, %v864
    %v867 = vmul.f32 %v149, %v864
    %870 = vrot.lane.b32.xlu0 %v866, 48
    %v871 = vpop.permute.xlu0 %870
    %872 = vrot.lane.b32.xlu0 %v867, 48
    %v873 = vpop.permute.xlu0 %872
    %v876 = vsel %vm162, %v871, 0.0
    %877 = vadd.xlane.f32.xlu0 %v876
    %v878 = vpop.xlane.xlu0 %877
    %v879 = vsel %vm162, %v873, 0.0
    %880 = vadd.xlane.f32.xlu0 %v879
    %v881 = vpop.xlane.xlu0 %880
    %v884 = vlaneseq
    %v885 = vshrl.u32 %v884, 7
    %v886 = vsub.s32 %v186, %v885
    %v887 = vrot.slane %v878, %v886
    %v888 = vlaneseq
    %v889 = vshrl.u32 %v888, 7
    %v890 = vsub.s32 %v186, %v889
    %v891 = vrot.slane %v881, %v890
    %v892 = vsel %vm195, %v887, %v887
    %v893 = vsel %vm197, %v887, %v892
    %v894 = vsel %vm199, %v887, %v893
    %v895 = vsel %vm201, %v887, %v894
    %v896 = vsel %vm203, %v887, %v895
    %v897 = vsel %vm205, %v887, %v896
    %v898 = vsel %vm195, %v891, %v891
    %v899 = vsel %vm197, %v891, %v898
    %v900 = vsel %vm199, %v891, %v899
    %v901 = vsel %vm201, %v891, %v900
    %v902 = vsel %vm203, %v891, %v901
    %v903 = vsel %vm205, %v891, %v902
    %v906 = vadd.f32 %v854, %v897
    %v907 = vadd.f32 %v857, %v903
    %vm908 = vcmp.gt.f32.partialorder %v906, 0.0
    %vm909 = vcmp.gt.f32.partialorder %v907, 0.0
    %v910 = vmul.f32 %v906, 0.2
    %v911 = vmul.f32 %v907, 0.2
    %v912 = vsel %vm908, %v906, %v910
    %v913 = vsel %vm909, %v907, %v911
    %v914 = vsel %vm403, %v912, 0.0
    %v915 = vsel %vm404, %v913, 0.0
    %v916 = vadd.f32 %v828, %v914
    %v917 = vadd.f32 %v829, %v915
    %v918 = vsel %vm409, %v916, -1e+30
    %v919 = vsel %vm410, %v917, -1e+30
    %v920 = vsel %vm413, %v918, -inf
    %921 = vmax.xlane.f32.xlu0 %v920
    %v922 = vpop.xlane.xlu0 %921
    %v923 = vsel %vm413, %v919, -inf
    %924 = vmax.xlane.f32.xlu0 %v923
    %v925 = vpop.xlane.xlu0 %924
    %v926 = vsub.f32 %v918, %v922
    %v927 = vsub.f32 %v919, %v925
    %v928 = vmul.f32 %v926, 1.442695
    %v929 = vpow.pop %v928
    %v930 = vmul.f32 %v927, 1.442695
    %v931 = vpow.pop %v930
    %v932 = vsel %vm413, %v929, 0.0
    %933 = vadd.xlane.f32.xlu0 %v932
    %v934 = vpop.xlane.xlu0 %933
    %v935 = vsel %vm413, %v931, 0.0
    %936 = vadd.xlane.f32.xlu0 %v935
    %v937 = vpop.xlane.xlu0 %936
    %v938 = vrcp.pop %v934
    %v939 = vrcp.pop %v937
    %v940 = vmul.f32 %v929, %v938
    %v941 = vmul.f32 %v931, %v939
    %942 = vxpose.xlu0.b32.start [1/16] %v940, 128
    %943 = vxpose.xlu0.b32.cont [2/16] 0.0, 128
    %944 = vxpose.xlu0.b32.cont [3/16] 0.0, 128
    %945 = vxpose.xlu0.b32.cont [4/16] 0.0, 128
    %946 = vxpose.xlu0.b32.cont [5/16] 0.0, 128
    %947 = vxpose.xlu0.b32.cont [6/16] 0.0, 128
    %948 = vxpose.xlu0.b32.cont [7/16] 0.0, 128
    %949 = vxpose.xlu0.b32.cont [8/16] 0.0, 128
    %950 = vxpose.xlu0.b32.cont [9/16] 0.0, 128
    %951 = vxpose.xlu0.b32.cont [10/16] 0.0, 128
    %952 = vxpose.xlu0.b32.cont [11/16] 0.0, 128
    %953 = vxpose.xlu0.b32.cont [12/16] 0.0, 128
    %954 = vxpose.xlu0.b32.cont [13/16] 0.0, 128
    %955 = vxpose.xlu0.b32.cont [14/16] 0.0, 128
    %956 = vxpose.xlu0.b32.cont [15/16] 0.0, 128
    %957 = vxpose.xlu0.b32.end [16/16] 0.0, 128
    %v958 = vpop.trf.xlu0
    %v959 = vpop.trf.xlu0
    %v960 = vpop.trf.xlu0
    %v961 = vpop.trf.xlu0
    %v962 = vpop.trf.xlu0
    %v963 = vpop.trf.xlu0
    %v964 = vpop.trf.xlu0
    %v965 = vpop.trf.xlu0
    %v966 = vpop.trf.xlu0
    %v967 = vpop.trf.xlu0
    %v968 = vpop.trf.xlu0
    %v969 = vpop.trf.xlu0
    %v970 = vpop.trf.xlu0
    %v971 = vpop.trf.xlu0
    %v972 = vpop.trf.xlu0
    %v973 = vpop.trf.xlu0
    %974 = vxpose.xlu0.b32.start [1/16] %v941, 128
    %975 = vxpose.xlu0.b32.cont [2/16] 0.0, 128
    %976 = vxpose.xlu0.b32.cont [3/16] 0.0, 128
    %977 = vxpose.xlu0.b32.cont [4/16] 0.0, 128
    %978 = vxpose.xlu0.b32.cont [5/16] 0.0, 128
    %979 = vxpose.xlu0.b32.cont [6/16] 0.0, 128
    %980 = vxpose.xlu0.b32.cont [7/16] 0.0, 128
    %981 = vxpose.xlu0.b32.cont [8/16] 0.0, 128
    %982 = vxpose.xlu0.b32.cont [9/16] 0.0, 128
    %983 = vxpose.xlu0.b32.cont [10/16] 0.0, 128
    %984 = vxpose.xlu0.b32.cont [11/16] 0.0, 128
    %985 = vxpose.xlu0.b32.cont [12/16] 0.0, 128
    %986 = vxpose.xlu0.b32.cont [13/16] 0.0, 128
    %987 = vxpose.xlu0.b32.cont [14/16] 0.0, 128
    %988 = vxpose.xlu0.b32.cont [15/16] 0.0, 128
    %989 = vxpose.xlu0.b32.end [16/16] 0.0, 128
    %v990 = vpop.trf.xlu0
    %v991 = vpop.trf.xlu0
    %v992 = vpop.trf.xlu0
    %v993 = vpop.trf.xlu0
    %v994 = vpop.trf.xlu0
    %v995 = vpop.trf.xlu0
    %v996 = vpop.trf.xlu0
    %v997 = vpop.trf.xlu0
    %v998 = vpop.trf.xlu0
    %v999 = vpop.trf.xlu0
    %v1000 = vpop.trf.xlu0
    %v1001 = vpop.trf.xlu0
    %v1002 = vpop.trf.xlu0
    %v1003 = vpop.trf.xlu0
    %v1004 = vpop.trf.xlu0
    %v1005 = vpop.trf.xlu0
    %1006 = vrot.lane.b32.xlu0 %v144, 48
    %v1007 = vpop.permute.xlu0 %1006
    %v1010 = vsel %vm413, %v958, 0
    %1012 = vmatprep.subr.mxu0 0.0
    %1013 = vmatpush1.msra.mxu0 %v1007
    %1014 = vmatprep.subr.mxu0 0.0
    %1015 = vmatpush1.msra.mxu0 0.0
    %1016 = vmatprep.subr.mxu0 0.0
    %1017 = vmatpush1.msra.mxu0 0.0
    %1018 = vmatprep.subr.mxu0 0.0
    %1019 = vmatpush1.msra.mxu0 0.0
    %1020 = vmatprep.subr.mxu0 0.0
    %1021 = vmatpush1.msra.mxu0 0.0
    %1022 = vmatprep.subr.mxu0 0.0
    %1023 = vmatpush1.msra.mxu0 0.0
    %1024 = vmatprep.subr.mxu0 0.0
    %1025 = vmatpush1.msra.mxu0 0.0
    %1026 = vmatprep.subr.mxu0 0.0
    %1027 = vmatpush1.msra.mxu0 0.0
    %1028 = vmatprep.subr.mxu0 0.0
    %1029 = vmatpush1.msra.mxu0 0.0
    %1030 = vmatprep.subr.mxu0 0.0
    %1031 = vmatpush1.msra.mxu0 0.0
    %1032 = vmatprep.subr.mxu0 0.0
    %1033 = vmatpush1.msra.mxu0 0.0
    %1034 = vmatprep.subr.mxu0 0.0
    %1035 = vmatpush1.msra.mxu0 0.0
    %1036 = vmatprep.subr.mxu0 0.0
    %1037 = vmatpush1.msra.mxu0 0.0
    %1038 = vmatprep.subr.mxu0 0.0
    %1039 = vmatpush1.msra.mxu0 0.0
    %1040 = vmatprep.subr.mxu0 0.0
    %1041 = vmatpush1.msra.mxu0 0.0
    %1042 = vmatprep.subr.mxu0 0.0
    %1043 = vmatpush1.msra.mxu0 0.0
    %1044 = vmatprep.subr.mxu0 0.0
    %1045 = vmatpush1.msra.mxu0 0.0
    %1046 = vmatprep.subr.mxu0 0.0
    %1047 = vmatpush1.msra.mxu0 0.0
    %1048 = vmatprep.subr.mxu0 0.0
    %1049 = vmatpush1.msra.mxu0 0.0
    %1050 = vmatprep.subr.mxu0 0.0
    %1051 = vmatpush1.msra.mxu0 0.0
    %1052 = vmatprep.subr.mxu0 0.0
    %1053 = vmatpush1.msra.mxu0 0.0
    %1054 = vmatprep.subr.mxu0 0.0
    %1055 = vmatpush1.msra.mxu0 0.0
    %1056 = vmatprep.subr.mxu0 0.0
    %1057 = vmatpush1.msra.mxu0 0.0
    %1058 = vmatprep.subr.mxu0 0.0
    %1059 = vmatpush1.msra.mxu0 0.0
    %1060 = vmatprep.subr.mxu0 0.0
    %1061 = vmatpush1.msra.mxu0 0.0
    %1062 = vmatprep.subr.mxu0 0.0
    %1063 = vmatpush1.msra.mxu0 0.0
    %1064 = vmatprep.subr.mxu0 0.0
    %1065 = vmatpush1.msra.mxu0 0.0
    %1066 = vmatprep.subr.mxu0 0.0
    %1067 = vmatpush1.msra.mxu0 0.0
    %1068 = vmatprep.subr.mxu0 0.0
    %1069 = vmatpush1.msra.mxu0 0.0
    %1070 = vmatprep.subr.mxu0 0.0
    %1071 = vmatpush1.msra.mxu0 0.0
    %1072 = vmatprep.subr.mxu0 0.0
    %1073 = vmatpush1.msra.mxu0 0.0
    %1074 = vmatprep.subr.mxu0 0.0
    %1075 = vmatpush1.msra.mxu0 0.0
    %1076 = vmatprep.mubr.f32.mxu0 0.0
    %1077 = vmatmul.mubr.f32.gmra.mrb[0].mxu0 %v1010
    %v1078 = vpop.f32.mrb[0].mxu0
    %v1079 = vadd.f32 0.0, %v1078
    %v1080 = vpop.f32.mrb[0].mxu0
    %1081 = vdwg.mxu0
    %1082 = vrot.lane.b32.xlu0 %v149, 48
    %v1083 = vpop.permute.xlu0 %1082
    %v1086 = vsel %vm413, %v990, 0
    %1088 = vmatprep.subr.mxu0 0.0
    %1089 = vmatpush1.msra.mxu0 %v1083
    %1090 = vmatprep.subr.mxu0 0.0
    %1091 = vmatpush1.msra.mxu0 0.0
    %1092 = vmatprep.subr.mxu0 0.0
    %1093 = vmatpush1.msra.mxu0 0.0
    %1094 = vmatprep.subr.mxu0 0.0
    %1095 = vmatpush1.msra.mxu0 0.0
    %1096 = vmatprep.subr.mxu0 0.0
    %1097 = vmatpush1.msra.mxu0 0.0
    %1098 = vmatprep.subr.mxu0 0.0
    %1099 = vmatpush1.msra.mxu0 0.0
    %1100 = vmatprep.subr.mxu0 0.0
    %1101 = vmatpush1.msra.mxu0 0.0
    %1102 = vmatprep.subr.mxu0 0.0
    %1103 = vmatpush1.msra.mxu0 0.0
    %1104 = vmatprep.subr.mxu0 0.0
    %1105 = vmatpush1.msra.mxu0 0.0
    %1106 = vmatprep.subr.mxu0 0.0
    %1107 = vmatpush1.msra.mxu0 0.0
    %1108 = vmatprep.subr.mxu0 0.0
    %1109 = vmatpush1.msra.mxu0 0.0
    %1110 = vmatprep.subr.mxu0 0.0
    %1111 = vmatpush1.msra.mxu0 0.0
    %1112 = vmatprep.subr.mxu0 0.0
    %1113 = vmatpush1.msra.mxu0 0.0
    %1114 = vmatprep.subr.mxu0 0.0
    %1115 = vmatpush1.msra.mxu0 0.0
    %1116 = vmatprep.subr.mxu0 0.0
    %1117 = vmatpush1.msra.mxu0 0.0
    %1118 = vmatprep.subr.mxu0 0.0
    %1119 = vmatpush1.msra.mxu0 0.0
    %1120 = vmatprep.subr.mxu0 0.0
    %1121 = vmatpush1.msra.mxu0 0.0
    %1122 = vmatprep.subr.mxu0 0.0
    %1123 = vmatpush1.msra.mxu0 0.0
    %1124 = vmatprep.subr.mxu0 0.0
    %1125 = vmatpush1.msra.mxu0 0.0
    %1126 = vmatprep.subr.mxu0 0.0
    %1127 = vmatpush1.msra.mxu0 0.0
    %1128 = vmatprep.subr.mxu0 0.0
    %1129 = vmatpush1.msra.mxu0 0.0
    %1130 = vmatprep.subr.mxu0 0.0
    %1131 = vmatpush1.msra.mxu0 0.0
    %1132 = vmatprep.subr.mxu0 0.0
    %1133 = vmatpush1.msra.mxu0 0.0
    %1134 = vmatprep.subr.mxu0 0.0
    %1135 = vmatpush1.msra.mxu0 0.0
    %1136 = vmatprep.subr.mxu0 0.0
    %1137 = vmatpush1.msra.mxu0 0.0
    %1138 = vmatprep.subr.mxu0 0.0
    %1139 = vmatpush1.msra.mxu0 0.0
    %1140 = vmatprep.subr.mxu0 0.0
    %1141 = vmatpush1.msra.mxu0 0.0
    %1142 = vmatprep.subr.mxu0 0.0
    %1143 = vmatpush1.msra.mxu0 0.0
    %1144 = vmatprep.subr.mxu0 0.0
    %1145 = vmatpush1.msra.mxu0 0.0
    %1146 = vmatprep.subr.mxu0 0.0
    %1147 = vmatpush1.msra.mxu0 0.0
    %1148 = vmatprep.subr.mxu0 0.0
    %1149 = vmatpush1.msra.mxu0 0.0
    %1150 = vmatprep.subr.mxu0 0.0
    %1151 = vmatpush1.msra.mxu0 0.0
    %1152 = vmatprep.mubr.f32.mxu0 0.0
    %1153 = vmatmul.mubr.f32.gmra.mrb[0].mxu0 %v1086
    %v1154 = vpop.f32.mrb[0].mxu0
    %v1155 = vadd.f32 0.0, %v1154
    %v1156 = vpop.f32.mrb[0].mxu0
    %1157 = vdwg.mxu0
    %1160 = vrot.lane.b32.xlu0 %v1079, 16
    %v1161 = vpop.permute.xlu0 %1160
    %1162 = vrot.lane.b32.xlu0 %v1155, 16
    %v1163 = vpop.permute.xlu0 %1162
    %v1166 = vsel %vm162, %v574, %v1161
    %v1167 = vsel %vm162, %v651, %v1163
    %v1168 = vmax.f32 %v1166, 0.0
    %v1169 = vmax.f32 %v1167, 0.0
    %1170 = vst.msk [vmem:[#allocation8] sm:$0xff] %vm70, %v1168
    %1171 = vst.msk [vmem:[#allocation8 + $0x8] sm:$0xff] %vm70, %v1169
    // Predicated region
    $region34: #{tpu_custom_call.1} parent=1 // pred_check
      _
    $region35: #{tpu_custom_call.1} parent=1 // pred_check_branch
      %1173 = sbr.rel (0) target = $region37
    $region36: #{tpu_custom_call.1} parent=1 // pred_region
      %s1175 = ssub.s32 256, 256
      %1176 = vsyncadd [#allocation4], %s1175
      %s1177 = sshll.u32 [#allocation8], 4
      %s1178 = int_to_ptr.vmem [resolvable:$true] %s1177
      %1183 = dma.vmem_to_hbm [thread:$0]  %s1178, 256, %s5, [#allocation4], 128, 128, 8
    $region37: #{tpu_custom_call.1} parent=1 // pred_fallthru
      _
    // Predicated region
    $region38: #{tpu_custom_call.1} parent=1 // pred_check
      _
    $region39: #{tpu_custom_call.1} parent=1 // pred_check_branch
      %1185 = sbr.rel (0) target = $region41
    $region40: #{tpu_custom_call.1} parent=1 // pred_region
      %1186 = dma.done [#allocation4], 256
    $region41: #{tpu_custom_call.1} parent=1 // pred_fallthru
      _
    %1187 = vsyncpa [#allocation3], 1
    %1188 = vsyncpa [#allocation6], 1
    %1189 = vsyncpa [#allocation4], 1

</llo_original>
